<compile_context>
chip_gen: v5e
topology: v5e:2x2
jax: 0.10.0
libtpu: 0.0.40
codegen_flags: <defaults>
</compile_context>

<pallas_src>
import functools
import math

import jax
import jax.numpy as jnp
import numpy as np
from jax.experimental import pallas as pl
from jax.experimental.pallas import tpu as pltpu

_LANE = 128
_CHUNK = 128          # lane-chunk width for the VALU (GELU + B-spline) phase


def _round_up(v, m):
    return ((v + m - 1) // m) * m


# --------------------------------------------------------------------------
# Fused KAN grouped conv kernel
# --------------------------------------------------------------------------
def _kan_conv_kernel(x_ref, w_ref, out_ref, feat_ref, *,
                     knots, spline_order, cin_g, cout_g,
                     kh, kw, dil, wp, t_q, n_fc, pad_guard):
    """One (group, batch, spatial-tile) step.

    x_ref:    (1, 1, cin_g, n_p_pad) f32  sentinel-padded input, flattened
              spatial (resident across the spatial-tile grid axis).
    w_ref:    (1, kh*kw, cout_g, nsc) f32 per-tap stacked [base|spline] weights.
    out_ref:  (1, 1, cout_g, t_q)     f32 flattened (padded-width) output cols.
    feat_ref: (nsc, n_fc)             f32 per-pixel feature stack scratch.
    """
    n_knots = len(knots)
    col0 = pl.program_id(2) * t_q
    inv_sqrt2 = 1.0 / math.sqrt(2.0)

    # ---- phase 1: per-pixel GELU + B-spline bases (VALU), lane-chunked ------
    def chunk_body(ci, carry):
        src = pl.multiple_of(col0 + ci * _CHUNK, _CHUNK)
        dst = pl.multiple_of(ci * _CHUNK, _CHUNK)
        x = x_ref[0, 0, :, pl.ds(src, _CHUNK)]             # (cin_g, 128) f32

        # exact (erf) GELU; sentinel-padded pixels forced to 0 so they match
        # the reference "activate, then zero-pad, then conv" semantics.
        g = 0.5 * x * (1.0 + jax.lax.erf(x * inv_sqrt2))
        g = jnp.where(x > pad_guard, g, 0.0)
        feat_ref[0:cin_g, pl.ds(dst, _CHUNK)] = g

        # Cox–de Boor recursion.  d_i = x - knot_i precomputed and reused;
        # all divides are compile-time reciprocal multiplies.
        d = [x - knots[i] for i in range(n_knots)]
        b = [jnp.where((d[i] >= 0.0) & (d[i + 1] < 0.0), 1.0, 0.0)
             for i in range(n_knots - 1)]
        for k in range(1, spline_order + 1):
            nb = []
            for i in range(len(b) - 1):
                den1 = knots[i + k] - knots[i]
                den2 = knots[i + k + 1] - knots[i + 1]
                inv1 = (1.0 / den1) if den1 != 0.0 else 1.0
                inv2 = (1.0 / den2) if den2 != 0.0 else 1.0
                nb.append((d[i] * inv1) * b[i] + (-d[i + k + 1] * inv2) * b[i + 1])
            b = nb

        for s in range(len(b)):                             # len(b) == n_bases
            feat_ref[(s + 1) * cin_g:(s + 2) * cin_g, pl.ds(dst, _CHUNK)] = b[s]
        return carry

    jax.lax.fori_loop(0, n_fc // _CHUNK, chunk_body, 0)

    # ---- phase 2: grouped conv = sum of per-tap MXU dots ---------------------
    acc = None
    for t in range(kh * kw):
        i, j = divmod(t, kw)
        off = i * dil * wp + j * dil                        # static lane offset
        part = jnp.dot(w_ref[0, t], feat_ref[:, pl.ds(off, t_q)],
                       preferred_element_type=jnp.float32)
        acc = part if acc is None else acc + part
    out_ref[0, 0] = acc


def fused_kan_conv(xflat, w_tap, *, knots, spline_order, cin_g, cout_g,
                   kh, kw, dil, wp, t_q, n_q_pad, n_fc, pad_guard, vmem_limit):
    """xflat: (B, G, cin_g, n_p_pad) f32,  w_tap: (G, kh*kw, cout_g, nsc) f32
    -> (B, G, cout_g, n_q_pad) f32  (base conv + spline conv, per group)."""
    B, G, _, n_p_pad = xflat.shape
    _, kk, _, nsc = w_tap.shape
    n_tiles = n_q_pad // t_q
    grid = (G, B, n_tiles)

    kernel = functools.partial(
        _kan_conv_kernel, knots=knots, spline_order=spline_order, cin_g=cin_g,
        cout_g=cout_g, kh=kh, kw=kw, dil=dil, wp=wp, t_q=t_q, n_fc=n_fc,
        pad_guard=pad_guard)

    cost = pl.CostEstimate(
        flops=2 * B * G * cout_g * kk * nsc * n_q_pad,
        transcendentals=B * G * cin_g * n_q_pad,
        bytes_accessed=(xflat.size * 4 + w_tap.size * 4
                        + B * G * cout_g * n_q_pad * 4))

    return pl.pallas_call(
        kernel,
        out_shape=jax.ShapeDtypeStruct((B, G, cout_g, n_q_pad), jnp.float32),
        grid_spec=pltpu.PrefetchScalarGridSpec(
            num_scalar_prefetch=0,
            grid=grid,
            in_specs=[
                # full (b, g) input slab, resident across spatial tiles
                pl.BlockSpec((1, 1, cin_g, n_p_pad), lambda g, b, r: (b, g, 0, 0)),
                # per-group tap weights, resident across (b, r)
                pl.BlockSpec((1, kk, cout_g, nsc), lambda g, b, r: (g, 0, 0, 0)),
            ],
            out_specs=pl.BlockSpec((1, 1, cout_g, t_q),
                                   lambda g, b, r: (b, g, 0, r)),
            scratch_shapes=[pltpu.VMEM((nsc, n_fc), jnp.float32)],
        ),
        compiler_params=pltpu.CompilerParams(
            dimension_semantics=("parallel", "parallel", "parallel"),
            vmem_limit_bytes=vmem_limit),
        cost_estimate=cost,
    )(xflat, w_tap)


# --------------------------------------------------------------------------
# InstanceNorm2d(affine=False) + per-group PReLU
# --------------------------------------------------------------------------
def _norm_prelu_kernel(y_ref, a_ref, o_ref, *, eps):
    y = y_ref[0]                                            # (ct, No) f32
    inv_n = 1.0 / y.shape[-1]
    mean = jnp.sum(y, axis=-1, keepdims=True) * inv_n
    yc = y - mean                                           # two-pass variance
    var = jnp.sum(yc * yc, axis=-1, keepdims=True) * inv_n
    yn = yc * jax.lax.rsqrt(var + eps)
    a = a_ref[...]                                          # (ct, 1)
    o_ref[0] = jnp.where(yn >= 0.0, yn, a * yn)


def _choose_channel_tile(c, no):
    if c % 8 != 0:
        return c
    ct = 8
    while (c % (ct * 2) == 0) and ((ct * 2) * no * 4 <= (4 << 20)):
        ct *= 2
    return ct


def norm_prelu(y, alpha_vec, *, eps=1e-5):
    """y: (B, C, No) f32, alpha_vec: (C, 1) -> same shape."""
    B, C, no = y.shape
    ct = _choose_channel_tile(C, no)
    return pl.pallas_call(
        functools.partial(_norm_prelu_kernel, eps=eps),
        out_shape=jax.ShapeDtypeStruct((B, C, no), y.dtype),
        grid_spec=pltpu.PrefetchScalarGridSpec(
            num_scalar_prefetch=0,
            grid=(B, C // ct),
            in_specs=[pl.BlockSpec((1, ct, no), lambda b, c: (b, c, 0)),
                      pl.BlockSpec((ct, 1), lambda b, c: (c, 0))],
            out_specs=pl.BlockSpec((1, ct, no), lambda b, c: (b, c, 0)),
        ),
        compiler_params=pltpu.CompilerParams(
            dimension_semantics=("parallel", "parallel")),
    )(y, alpha_vec)


# --------------------------------------------------------------------------
# KANConv2D layer (parameters initialized deterministically in-script)
# --------------------------------------------------------------------------
class KANConv2DPallas:
    def __init__(self, input_dim, output_dim, spline_order, kernel_size,
                 groups=1, padding=0, stride=1, dilation=1,
                 grid_size=20, grid_range=(-1.0, 1.0), dropout=0.0, key=None):
        assert groups > 0
        assert input_dim % groups == 0 and output_dim % groups == 0
        self.input_dim = input_dim
        self.output_dim = output_dim
        self.spline_order = spline_order
        self.kernel_size = kernel_size
        self.groups = groups
        self.padding = padding
        self.stride = stride
        self.dilation = dilation
        self.grid_size = grid_size
        # TODO(synk): dropout (nn.Dropout2d) is a training-time op; default p=0
        # is an identity and is not implemented here.

        h = (grid_range[1] - grid_range[0]) / grid_size
        knots = np.linspace(grid_range[0] - h * spline_order,
                            grid_range[1] + h * spline_order,
                            grid_size + 2 * spline_order + 1, dtype=np.float32)
        self.knots = tuple(float(v) for v in knots)

        # Spatial-padding sentinel: below the knot span so every B-spline basis
        # is exactly 0 there; GELU is masked to 0 in-kernel.  Reproduces
        # "activate / compute bases on x, then zero-pad, then conv".
        self.pad_value = float(min(-1.0e4, self.knots[0] - 1.0e3))
        self.pad_guard = self.pad_value * 0.5

        cin_g = input_dim // groups
        cout_g = output_dim // groups
        n_bases = grid_size + spline_order
        n_stack = n_bases + 1
        kk = kernel_size * kernel_size
        self.cin_g, self.cout_g = cin_g, cout_g
        self.n_bases, self.n_stack = n_bases, n_stack

        if key is None:
            key = jax.random.PRNGKey(0)
        keys = jax.random.split(key, 2 * groups)

        def kaiming_uniform(k, shape):
            fan_in = shape[1] * shape[2] * shape[3]
            bound = math.sqrt(3.0 / fan_in)                 # gain=1 ('linear')
            return jax.random.uniform(k, shape, jnp.float32, -bound, bound)

        taps = []
        for g in range(groups):
            base_w = kaiming_uniform(keys[2 * g],
                                     (cout_g, cin_g, kernel_size, kernel_size))
            spline_w = kaiming_uniform(keys[2 * g + 1],
                                       (cout_g, n_bases * cin_g,
                                        kernel_size, kernel_size))
            # PyTorch spline-conv in-channel order is (cin, basis).
            sp = spline_w.reshape(cout_g, cin_g, n_bases,
                                  kernel_size, kernel_size)
            sp = sp.transpose(0, 2, 1, 3, 4)      # (cout_g, n_bases, cin_g, kh, kw)
            w_full = jnp.concatenate([base_w[:, None], sp], axis=1)
            # (cout_g, n_stack, cin_g, kh, kw) -> (kh*kw, cout_g, n_stack*cin_g)
            w_t = w_full.transpose(3, 4, 0, 1, 2).reshape(kk, cout_g,
                                                          n_stack * cin_g)
            taps.append(w_t)
        self.w_tap = jnp.stack(taps, axis=0)      # (G, kk, cout_g, nsc) f32

        # nn.PReLU() default: one weight per group, init 0.25 -> per channel.
        alpha = jnp.full((groups,), 0.25, jnp.float32)
        self.alpha_vec = jnp.repeat(alpha, cout_g).reshape(output_dim, 1)

    # -- tiling helpers ----------------------------------------------------
    def _choose_tq(self, n_q, wp, off_pad):
        nsc = self.n_stack * self.cin_g
        # target ~16 padded image rows per tile, clamped to [128, 4096]
        t_q = _round_up(max(16 * wp, _LANE), _LANE)
        t_q = max(_LANE, min(t_q, 4096))
        t_q = min(t_q, _round_up(n_q, _LANE))
        budget = 12 << 20                          # f32 feature-scratch budget
        while t_q > _LANE and nsc * (t_q + off_pad) * 4 > budget:
            t_q -= _LANE
        return t_q

    @staticmethod
    def _vmem_limit_bytes(cin_g, n_p_pad, cout_g, t_q, n_fc, nsc, kk):
        need = (2 * cin_g * n_p_pad * 4            # resident input (dbl-buffer)
                + nsc * n_fc * 4                   # feature scratch
                + 2 * cout_g * t_q * 4             # output block (dbl-buffer)
                + 2 * kk * cout_g * nsc * 4        # weights (dbl-buffer)
                + (2 << 20))                       # headroom
        try:
            hw = int(pltpu.get_tpu_info().vmem_capacity_bytes)
        except Exception:
            hw = 64 << 20
        return int(min(hw * 9 // 10, max(32 << 20, 2 * need)))

    # -- forward -------------------------------------------------------------
    def __call__(self, x):
        B, C, H, W = x.shape
        assert C == self.input_dim
        ks, p, d, s = self.kernel_size, self.padding, self.dilation, self.stride
        G, cin_g, cout_g = self.groups, self.cin_g, self.cout_g
        nsc = self.n_stack * cin_g
        kk = ks * ks

        Hp, Wp = H + 2 * p, W + 2 * p
        Ho1 = Hp - d * (ks - 1)                    # stride-1 output extents
        Wo1 = Wp - d * (ks - 1)
        assert Ho1 > 0 and Wo1 > 0

        off_max = (ks - 1) * d * Wp + (ks - 1) * d
        off_pad = _round_up(off_max, _LANE) if off_max > 0 else 0
        n_q = Ho1 * Wp                             # flattened padded-width cols
        t_q = self._choose_tq(n_q, Wp, off_pad)
        n_q_pad = _round_up(n_q, t_q)
        n_fc = t_q + off_pad
        n_p_pad = n_q_pad + off_pad                # >= Hp*Wp by construction

        # sentinel-pad spatially and flatten (no im2col, no HBM inflation)
        x5 = x.reshape(B, G, cin_g, H, W)
        xp = jnp.pad(x5, ((0, 0), (0, 0), (0, 0), (p, p), (p, p)),
                     constant_values=self.pad_value)
        xflat = xp.reshape(B, G, cin_g, Hp * Wp)
        xflat = jnp.pad(xflat, ((0, 0), (0, 0), (0, 0), (0, n_p_pad - Hp * Wp)),
                        constant_values=self.pad_value)

        vmem_limit = self._vmem_limit_bytes(cin_g, n_p_pad, cout_g,
                                            t_q, n_fc, nsc, kk)
        yq = fused_kan_conv(
            xflat, self.w_tap, knots=self.knots, spline_order=self.spline_order,
            cin_g=cin_g, cout_g=cout_g, kh=ks, kw=ks, dil=d, wp=Wp,
            t_q=t_q, n_q_pad=n_q_pad, n_fc=n_fc, pad_guard=self.pad_guard,
            vmem_limit=vmem_limit)                 # (B, G, cout_g, n_q_pad)

        # drop the padded-width garbage columns (cheap strided copy in XLA)
        y = yq[..., :n_q].reshape(B, G, cout_g, Ho1, Wp)[..., :Wo1]
        if s > 1:
            # TODO(synk): stride>1 is computed as stride-1 conv + subsample
            # (exact but does s^2 extra work).
            y = y[:, :, :, ::s, ::s]
        Ho, Wo = y.shape[3], y.shape[4]

        y = y.reshape(B, self.output_dim, Ho * Wo)
        y = norm_prelu(y, self.alpha_vec, eps=1e-5)
        return y.reshape(B, self.output_dim, Ho, Wo)


# --------------------------------------------------------------------------
if __name__ == "__main__":
    key = jax.random.PRNGKey(0)
    kx, kp = jax.random.split(key)

    # batch=2, input_dim=4, output_dim=8, H=W=16, groups=2, 3x3 conv, pad=1
    x = jax.random.normal(kx, (2, 4, 16, 16), dtype=jnp.float32)

    layer = KANConv2DPallas(input_dim=4, output_dim=8, spline_order=3,
                            kernel_size=3, groups=2, padding=1, stride=1,
                            dilation=1, grid_size=5, grid_range=(-1.0, 1.0),
                            key=kp)

    fwd = jax.jit(layer.__call__)
    y = jax.block_until_ready(fwd(x))
    assert y.shape == (2, 8, 16, 16), y.shape
    assert bool(jnp.all(jnp.isfinite(y)))
    print("KERNEL_OK")
</pallas_src>

<mosaic_0001>
module attributes {stable_mosaic.version = 11 : i64} {
  func.func @_kan_conv_kernel(%arg0: i32, %arg1: i32, %arg2: i32, %arg3: memref<1x1x2x512xf32, #tpu.memory_space<vmem>>, %arg4: memref<1x9x4x18xf32, #tpu.memory_space<vmem>>, %arg5: memref<1x1x4x384xf32, #tpu.memory_space<vmem>>, %arg6: memref<18x512xf32, #tpu.memory_space<vmem>>) attributes {dimension_semantics = [#tpu.dimension_semantics<parallel>, #tpu.dimension_semantics<parallel>, #tpu.dimension_semantics<parallel>], iteration_bounds = array<i64: 2, 2, 1>, scalar_prefetch = 0 : i64, scratch_operands = 1 : i64, tpu.core_type = #tpu.core_type<tc>, window_params = [{transform_indices = @transform_0, window_bounds = array<i64: 1, 1, 2, 512>}, {transform_indices = @transform_1, window_bounds = array<i64: 1, 9, 4, 18>}, {transform_indices = @transform_2, window_bounds = array<i64: 1, 1, 4, 384>}]} {
    %c384_i32 = arith.constant 384 : i32
    %0 = arith.muli %arg2, %c384_i32 : i32
    %c0_i32 = arith.constant 0 : i32
    %c4_i32 = arith.constant 4 : i32
    %1 = arith.addi %c0_i32, %c4_i32 : i32
    %c1_i32 = arith.constant 1 : i32
    scf.for %arg7 = %c0_i32 to %1 step %c1_i32  : i32 {
      %c128_i32 = arith.constant 128 : i32
      %49 = arith.muli %arg7, %c128_i32 : i32
      %50 = arith.addi %0, %49 : i32
      %51 = tpu.assume_multiple %50, 128 : i32
      %c128_i32_52 = arith.constant 128 : i32
      %52 = arith.muli %arg7, %c128_i32_52 : i32
      %53 = tpu.assume_multiple %52, 128 : i32
      %c0_53 = arith.constant 0 : index
      %c0_54 = arith.constant 0 : index
      %c0_55 = arith.constant 0 : index
      %54 = arith.index_cast %51 : i32 to index
      %55 = vector.load %arg3[%c0_53, %c0_54, %c0_55, %54] : memref<1x1x2x512xf32, #tpu.memory_space<vmem>>, vector<1x1x2x128xf32>
      %56 = vector.shape_cast %55 : vector<1x1x2x128xf32> to vector<2x128xf32>
      %cst_56 = arith.constant 5.000000e-01 : f32
      %57 = vector.broadcast %cst_56 : f32 to vector<2x128xf32>
      %58 = arith.mulf %57, %56 : vector<2x128xf32>
      %cst_57 = arith.constant 0.707106769 : f32
      %59 = vector.broadcast %cst_57 : f32 to vector<2x128xf32>
      %60 = arith.mulf %56, %59 : vector<2x128xf32>
      %61 = math.erf %60 : vector<2x128xf32>
      %cst_58 = arith.constant 1.000000e+00 : f32
      %62 = vector.broadcast %cst_58 : f32 to vector<2x128xf32>
      %63 = arith.addf %62, %61 : vector<2x128xf32>
      %64 = arith.mulf %58, %63 : vector<2x128xf32>
      %cst_59 = arith.constant -5.000000e+03 : f32
      %65 = vector.broadcast %cst_59 : f32 to vector<2x128xf32>
      %66 = arith.cmpf ogt, %56, %65 : vector<2x128xf32>
      %cst_60 = arith.constant 0.000000e+00 : f32
      %67 = vector.broadcast %cst_60 : f32 to vector<2x128xf32>
      %68 = arith.select %66, %64, %67 : vector<2x128xi1>, vector<2x128xf32>
      %c0_61 = arith.constant 0 : index
      %69 = arith.index_cast %53 : i32 to index
      %70 = vector.load %arg6[%c0_61, %69] : memref<18x512xf32, #tpu.memory_space<vmem>>, vector<2x128xf32>
      tpu.vector_store %arg6[%c0_61, %69], %68 {strides = array<i32>} : memref<18x512xf32, #tpu.memory_space<vmem>>, vector<2x128xf32>,
      %cst_62 = arith.constant -2.200000e+00 : f32
      %71 = vector.broadcast %cst_62 : f32 to vector<2x128xf32>
      %72 = arith.subf %56, %71 : vector<2x128xf32>
      %cst_63 = arith.constant -1.800000e+00 : f32
      %73 = vector.broadcast %cst_63 : f32 to vector<2x128xf32>
      %74 = arith.subf %56, %73 : vector<2x128xf32>
      %cst_64 = arith.constant -1.400000e+00 : f32
      %75 = vector.broadcast %cst_64 : f32 to vector<2x128xf32>
      %76 = arith.subf %56, %75 : vector<2x128xf32>
      %cst_65 = arith.constant -1.000000e+00 : f32
      %77 = vector.broadcast %cst_65 : f32 to vector<2x128xf32>
      %78 = arith.subf %56, %77 : vector<2x128xf32>
      %cst_66 = arith.constant -6.000000e-01 : f32
      %79 = vector.broadcast %cst_66 : f32 to vector<2x128xf32>
      %80 = arith.subf %56, %79 : vector<2x128xf32>
      %cst_67 = arith.constant -2.000000e-01 : f32
      %81 = vector.broadcast %cst_67 : f32 to vector<2x128xf32>
      %82 = arith.subf %56, %81 : vector<2x128xf32>
      %cst_68 = arith.constant 2.000000e-01 : f32
      %83 = vector.broadcast %cst_68 : f32 to vector<2x128xf32>
      %84 = arith.subf %56, %83 : vector<2x128xf32>
      %cst_69 = arith.constant 6.000000e-01 : f32
      %85 = vector.broadcast %cst_69 : f32 to vector<2x128xf32>
      %86 = arith.subf %56, %85 : vector<2x128xf32>
      %cst_70 = arith.constant 1.000000e+00 : f32
      %87 = vector.broadcast %cst_70 : f32 to vector<2x128xf32>
      %88 = arith.subf %56, %87 : vector<2x128xf32>
      %cst_71 = arith.constant 1.400000e+00 : f32
      %89 = vector.broadcast %cst_71 : f32 to vector<2x128xf32>
      %90 = arith.subf %56, %89 : vector<2x128xf32>
      %cst_72 = arith.constant 1.800000e+00 : f32
      %91 = vector.broadcast %cst_72 : f32 to vector<2x128xf32>
      %92 = arith.subf %56, %91 : vector<2x128xf32>
      %cst_73 = arith.constant 2.200000e+00 : f32
      %93 = vector.broadcast %cst_73 : f32 to vector<2x128xf32>
      %94 = arith.subf %56, %93 : vector<2x128xf32>
      %cst_74 = arith.constant 0.000000e+00 : f32
      %95 = vector.broadcast %cst_74 : f32 to vector<2x128xf32>
      %96 = arith.cmpf oge, %72, %95 : vector<2x128xf32>
      %cst_75 = arith.constant 0.000000e+00 : f32
      %97 = vector.broadcast %cst_75 : f32 to vector<2x128xf32>
      %98 = arith.cmpf olt, %74, %97 : vector<2x128xf32>
      %99 = arith.andi %96, %98 : vector<2x128xi1>
      %cst_76 = arith.constant 1.000000e+00 : f32
      %cst_77 = arith.constant 0.000000e+00 : f32
      %100 = vector.broadcast %cst_76 : f32 to vector<2x128xf32>
      %101 = vector.broadcast %cst_77 : f32 to vector<2x128xf32>
      %102 = arith.select %99, %100, %101 : vector<2x128xi1>, vector<2x128xf32>
      %cst_78 = arith.constant 0.000000e+00 : f32
      %103 = vector.broadcast %cst_78 : f32 to vector<2x128xf32>
      %104 = arith.cmpf oge, %74, %103 : vector<2x128xf32>
      %cst_79 = arith.constant 0.000000e+00 : f32
      %105 = vector.broadcast %cst_79 : f32 to vector<2x128xf32>
      %106 = arith.cmpf olt, %76, %105 : vector<2x128xf32>
      %107 = arith.andi %104, %106 : vector<2x128xi1>
      %cst_80 = arith.constant 1.000000e+00 : f32
      %cst_81 = arith.constant 0.000000e+00 : f32
      %108 = vector.broadcast %cst_80 : f32 to vector<2x128xf32>
      %109 = vector.broadcast %cst_81 : f32 to vector<2x128xf32>
      %110 = arith.select %107, %108, %109 : vector<2x128xi1>, vector<2x128xf32>
      %cst_82 = arith.constant 0.000000e+00 : f32
      %111 = vector.broadcast %cst_82 : f32 to vector<2x128xf32>
      %112 = arith.cmpf oge, %76, %111 : vector<2x128xf32>
      %cst_83 = arith.constant 0.000000e+00 : f32
      %113 = vector.broadcast %cst_83 : f32 to vector<2x128xf32>
      %114 = arith.cmpf olt, %78, %113 : vector<2x128xf32>
      %115 = arith.andi %112, %114 : vector<2x128xi1>
      %cst_84 = arith.constant 1.000000e+00 : f32
      %cst_85 = arith.constant 0.000000e+00 : f32
      %116 = vector.broadcast %cst_84 : f32 to vector<2x128xf32>
      %117 = vector.broadcast %cst_85 : f32 to vector<2x128xf32>
      %118 = arith.select %115, %116, %117 : vector<2x128xi1>, vector<2x128xf32>
      %cst_86 = arith.constant 0.000000e+00 : f32
      %119 = vector.broadcast %cst_86 : f32 to vector<2x128xf32>
      %120 = arith.cmpf oge, %78, %119 : vector<2x128xf32>
      %cst_87 = arith.constant 0.000000e+00 : f32
      %121 = vector.broadcast %cst_87 : f32 to vector<2x128xf32>
      %122 = arith.cmpf olt, %80, %121 : vector<2x128xf32>
      %123 = arith.andi %120, %122 : vector<2x128xi1>
      %cst_88 = arith.constant 1.000000e+00 : f32
      %cst_89 = arith.constant 0.000000e+00 : f32
      %124 = vector.broadcast %cst_88 : f32 to vector<2x128xf32>
      %125 = vector.broadcast %cst_89 : f32 to vector<2x128xf32>
      %126 = arith.select %123, %124, %125 : vector<2x128xi1>, vector<2x128xf32>
      %cst_90 = arith.constant 0.000000e+00 : f32
      %127 = vector.broadcast %cst_90 : f32 to vector<2x128xf32>
      %128 = arith.cmpf oge, %80, %127 : vector<2x128xf32>
      %cst_91 = arith.constant 0.000000e+00 : f32
      %129 = vector.broadcast %cst_91 : f32 to vector<2x128xf32>
      %130 = arith.cmpf olt, %82, %129 : vector<2x128xf32>
      %131 = arith.andi %128, %130 : vector<2x128xi1>
      %cst_92 = arith.constant 1.000000e+00 : f32
      %cst_93 = arith.constant 0.000000e+00 : f32
      %132 = vector.broadcast %cst_92 : f32 to vector<2x128xf32>
      %133 = vector.broadcast %cst_93 : f32 to vector<2x128xf32>
      %134 = arith.select %131, %132, %133 : vector<2x128xi1>, vector<2x128xf32>
      %cst_94 = arith.constant 0.000000e+00 : f32
      %135 = vector.broadcast %cst_94 : f32 to vector<2x128xf32>
      %136 = arith.cmpf oge, %82, %135 : vector<2x128xf32>
      %cst_95 = arith.constant 0.000000e+00 : f32
      %137 = vector.broadcast %cst_95 : f32 to vector<2x128xf32>
      %138 = arith.cmpf olt, %84, %137 : vector<2x128xf32>
      %139 = arith.andi %136, %138 : vector<2x128xi1>
      %cst_96 = arith.constant 1.000000e+00 : f32
      %cst_97 = arith.constant 0.000000e+00 : f32
      %140 = vector.broadcast %cst_96 : f32 to vector<2x128xf32>
      %141 = vector.broadcast %cst_97 : f32 to vector<2x128xf32>
      %142 = arith.select %139, %140, %141 : vector<2x128xi1>, vector<2x128xf32>
      %cst_98 = arith.constant 0.000000e+00 : f32
      %143 = vector.broadcast %cst_98 : f32 to vector<2x128xf32>
      %144 = arith.cmpf oge, %84, %143 : vector<2x128xf32>
      %cst_99 = arith.constant 0.000000e+00 : f32
      %145 = vector.broadcast %cst_99 : f32 to vector<2x128xf32>
      %146 = arith.cmpf olt, %86, %145 : vector<2x128xf32>
      %147 = arith.andi %144, %146 : vector<2x128xi1>
      %cst_100 = arith.constant 1.000000e+00 : f32
      %cst_101 = arith.constant 0.000000e+00 : f32
      %148 = vector.broadcast %cst_100 : f32 to vector<2x128xf32>
      %149 = vector.broadcast %cst_101 : f32 to vector<2x128xf32>
      %150 = arith.select %147, %148, %149 : vector<2x128xi1>, vector<2x128xf32>
      %cst_102 = arith.constant 0.000000e+00 : f32
      %151 = vector.broadcast %cst_102 : f32 to vector<2x128xf32>
      %152 = arith.cmpf oge, %86, %151 : vector<2x128xf32>
      %cst_103 = arith.constant 0.000000e+00 : f32
      %153 = vector.broadcast %cst_103 : f32 to vector<2x128xf32>
      %154 = arith.cmpf olt, %88, %153 : vector<2x128xf32>
      %155 = arith.andi %152, %154 : vector<2x128xi1>
      %cst_104 = arith.constant 1.000000e+00 : f32
      %cst_105 = arith.constant 0.000000e+00 : f32
      %156 = vector.broadcast %cst_104 : f32 to vector<2x128xf32>
      %157 = vector.broadcast %cst_105 : f32 to vector<2x128xf32>
      %158 = arith.select %155, %156, %157 : vector<2x128xi1>, vector<2x128xf32>
      %cst_106 = arith.constant 0.000000e+00 : f32
      %159 = vector.broadcast %cst_106 : f32 to vector<2x128xf32>
      %160 = arith.cmpf oge, %88, %159 : vector<2x128xf32>
      %cst_107 = arith.constant 0.000000e+00 : f32
      %161 = vector.broadcast %cst_107 : f32 to vector<2x128xf32>
      %162 = arith.cmpf olt, %90, %161 : vector<2x128xf32>
      %163 = arith.andi %160, %162 : vector<2x128xi1>
      %cst_108 = arith.constant 1.000000e+00 : f32
      %cst_109 = arith.constant 0.000000e+00 : f32
      %164 = vector.broadcast %cst_108 : f32 to vector<2x128xf32>
      %165 = vector.broadcast %cst_109 : f32 to vector<2x128xf32>
      %166 = arith.select %163, %164, %165 : vector<2x128xi1>, vector<2x128xf32>
      %cst_110 = arith.constant 0.000000e+00 : f32
      %167 = vector.broadcast %cst_110 : f32 to vector<2x128xf32>
      %168 = arith.cmpf oge, %90, %167 : vector<2x128xf32>
      %cst_111 = arith.constant 0.000000e+00 : f32
      %169 = vector.broadcast %cst_111 : f32 to vector<2x128xf32>
      %170 = arith.cmpf olt, %92, %169 : vector<2x128xf32>
      %171 = arith.andi %168, %170 : vector<2x128xi1>
      %cst_112 = arith.constant 1.000000e+00 : f32
      %cst_113 = arith.constant 0.000000e+00 : f32
      %172 = vector.broadcast %cst_112 : f32 to vector<2x128xf32>
      %173 = vector.broadcast %cst_113 : f32 to vector<2x128xf32>
      %174 = arith.select %171, %172, %173 : vector<2x128xi1>, vector<2x128xf32>
      %cst_114 = arith.constant 0.000000e+00 : f32
      %175 = vector.broadcast %cst_114 : f32 to vector<2x128xf32>
      %176 = arith.cmpf oge, %92, %175 : vector<2x128xf32>
      %cst_115 = arith.constant 0.000000e+00 : f32
      %177 = vector.broadcast %cst_115 : f32 to vector<2x128xf32>
      %178 = arith.cmpf olt, %94, %177 : vector<2x128xf32>
      %179 = arith.andi %176, %178 : vector<2x128xi1>
      %cst_116 = arith.constant 1.000000e+00 : f32
      %cst_117 = arith.constant 0.000000e+00 : f32
      %180 = vector.broadcast %cst_116 : f32 to vector<2x128xf32>
      %181 = vector.broadcast %cst_117 : f32 to vector<2x128xf32>
      %182 = arith.select %179, %180, %181 : vector<2x128xi1>, vector<2x128xf32>
      %cst_118 = arith.constant 2.49999952 : f32
      %183 = vector.broadcast %cst_118 : f32 to vector<2x128xf32>
      %184 = arith.mulf %72, %183 : vector<2x128xf32>
      %185 = arith.mulf %184, %102 : vector<2x128xf32>
      %cst_119 = arith.constant 0.000000e+00 : f32
      %186 = vector.broadcast %cst_119 : f32 to vector<2x128xf32>
      %187 = arith.subf %186, %76 : vector<2x128xf32>
      %cst_120 = arith.constant 2.50000024 : f32
      %188 = vector.broadcast %cst_120 : f32 to vector<2x128xf32>
      %189 = arith.mulf %187, %188 : vector<2x128xf32>
      %190 = arith.mulf %189, %110 : vector<2x128xf32>
      %191 = arith.addf %185, %190 : vector<2x128xf32>
      %cst_121 = arith.constant 2.50000024 : f32
      %192 = vector.broadcast %cst_121 : f32 to vector<2x128xf32>
      %193 = arith.mulf %74, %192 : vector<2x128xf32>
      %194 = arith.mulf %193, %110 : vector<2x128xf32>
      %cst_122 = arith.constant 0.000000e+00 : f32
      %195 = vector.broadcast %cst_122 : f32 to vector<2x128xf32>
      %196 = arith.subf %195, %78 : vector<2x128xf32>
      %cst_123 = arith.constant 2.50000024 : f32
      %197 = vector.broadcast %cst_123 : f32 to vector<2x128xf32>
      %198 = arith.mulf %196, %197 : vector<2x128xf32>
      %199 = arith.mulf %198, %118 : vector<2x128xf32>
      %200 = arith.addf %194, %199 : vector<2x128xf32>
      %cst_124 = arith.constant 2.50000024 : f32
      %201 = vector.broadcast %cst_124 : f32 to vector<2x128xf32>
      %202 = arith.mulf %76, %201 : vector<2x128xf32>
      %203 = arith.mulf %202, %118 : vector<2x128xf32>
      %cst_125 = arith.constant 0.000000e+00 : f32
      %204 = vector.broadcast %cst_125 : f32 to vector<2x128xf32>
      %205 = arith.subf %204, %80 : vector<2x128xf32>
      %cst_126 = arith.constant 2.50000024 : f32
      %206 = vector.broadcast %cst_126 : f32 to vector<2x128xf32>
      %207 = arith.mulf %205, %206 : vector<2x128xf32>
      %208 = arith.mulf %207, %126 : vector<2x128xf32>
      %209 = arith.addf %203, %208 : vector<2x128xf32>
      %cst_127 = arith.constant 2.50000024 : f32
      %210 = vector.broadcast %cst_127 : f32 to vector<2x128xf32>
      %211 = arith.mulf %78, %210 : vector<2x128xf32>
      %212 = arith.mulf %211, %126 : vector<2x128xf32>
      %cst_128 = arith.constant 0.000000e+00 : f32
      %213 = vector.broadcast %cst_128 : f32 to vector<2x128xf32>
      %214 = arith.subf %213, %82 : vector<2x128xf32>
      %cst_129 = arith.constant 2.49999976 : f32
      %215 = vector.broadcast %cst_129 : f32 to vector<2x128xf32>
      %216 = arith.mulf %214, %215 : vector<2x128xf32>
      %217 = arith.mulf %216, %134 : vector<2x128xf32>
      %218 = arith.addf %212, %217 : vector<2x128xf32>
      %cst_130 = arith.constant 2.49999976 : f32
      %219 = vector.broadcast %cst_130 : f32 to vector<2x128xf32>
      %220 = arith.mulf %80, %219 : vector<2x128xf32>
      %221 = arith.mulf %220, %134 : vector<2x128xf32>
      %cst_131 = arith.constant 0.000000e+00 : f32
      %222 = vector.broadcast %cst_131 : f32 to vector<2x128xf32>
      %223 = arith.subf %222, %84 : vector<2x128xf32>
      %cst_132 = arith.constant 2.500000e+00 : f32
      %224 = vector.broadcast %cst_132 : f32 to vector<2x128xf32>
      %225 = arith.mulf %223, %224 : vector<2x128xf32>
      %226 = arith.mulf %225, %142 : vector<2x128xf32>
      %227 = arith.addf %221, %226 : vector<2x128xf32>
      %cst_133 = arith.constant 2.500000e+00 : f32
      %228 = vector.broadcast %cst_133 : f32 to vector<2x128xf32>
      %229 = arith.mulf %82, %228 : vector<2x128xf32>
      %230 = arith.mulf %229, %142 : vector<2x128xf32>
      %cst_134 = arith.constant 0.000000e+00 : f32
      %231 = vector.broadcast %cst_134 : f32 to vector<2x128xf32>
      %232 = arith.subf %231, %86 : vector<2x128xf32>
      %cst_135 = arith.constant 2.49999976 : f32
      %233 = vector.broadcast %cst_135 : f32 to vector<2x128xf32>
      %234 = arith.mulf %232, %233 : vector<2x128xf32>
      %235 = arith.mulf %234, %150 : vector<2x128xf32>
      %236 = arith.addf %230, %235 : vector<2x128xf32>
      %cst_136 = arith.constant 2.49999976 : f32
      %237 = vector.broadcast %cst_136 : f32 to vector<2x128xf32>
      %238 = arith.mulf %84, %237 : vector<2x128xf32>
      %239 = arith.mulf %238, %150 : vector<2x128xf32>
      %cst_137 = arith.constant 0.000000e+00 : f32
      %240 = vector.broadcast %cst_137 : f32 to vector<2x128xf32>
      %241 = arith.subf %240, %88 : vector<2x128xf32>
      %cst_138 = arith.constant 2.50000024 : f32
      %242 = vector.broadcast %cst_138 : f32 to vector<2x128xf32>
      %243 = arith.mulf %241, %242 : vector<2x128xf32>
      %244 = arith.mulf %243, %158 : vector<2x128xf32>
      %245 = arith.addf %239, %244 : vector<2x128xf32>
      %cst_139 = arith.constant 2.50000024 : f32
      %246 = vector.broadcast %cst_139 : f32 to vector<2x128xf32>
      %247 = arith.mulf %86, %246 : vector<2x128xf32>
      %248 = arith.mulf %247, %158 : vector<2x128xf32>
      %cst_140 = arith.constant 0.000000e+00 : f32
      %249 = vector.broadcast %cst_140 : f32 to vector<2x128xf32>
      %250 = arith.subf %249, %90 : vector<2x128xf32>
      %cst_141 = arith.constant 2.50000024 : f32
      %251 = vector.broadcast %cst_141 : f32 to vector<2x128xf32>
      %252 = arith.mulf %250, %251 : vector<2x128xf32>
      %253 = arith.mulf %252, %166 : vector<2x128xf32>
      %254 = arith.addf %248, %253 : vector<2x128xf32>
      %cst_142 = arith.constant 2.50000024 : f32
      %255 = vector.broadcast %cst_142 : f32 to vector<2x128xf32>
      %256 = arith.mulf %88, %255 : vector<2x128xf32>
      %257 = arith.mulf %256, %166 : vector<2x128xf32>
      %cst_143 = arith.constant 0.000000e+00 : f32
      %258 = vector.broadcast %cst_143 : f32 to vector<2x128xf32>
      %259 = arith.subf %258, %92 : vector<2x128xf32>
      %cst_144 = arith.constant 2.50000024 : f32
      %260 = vector.broadcast %cst_144 : f32 to vector<2x128xf32>
      %261 = arith.mulf %259, %260 : vector<2x128xf32>
      %262 = arith.mulf %261, %174 : vector<2x128xf32>
      %263 = arith.addf %257, %262 : vector<2x128xf32>
      %cst_145 = arith.constant 2.50000024 : f32
      %264 = vector.broadcast %cst_145 : f32 to vector<2x128xf32>
      %265 = arith.mulf %90, %264 : vector<2x128xf32>
      %266 = arith.mulf %265, %174 : vector<2x128xf32>
      %cst_146 = arith.constant 0.000000e+00 : f32
      %267 = vector.broadcast %cst_146 : f32 to vector<2x128xf32>
      %268 = arith.subf %267, %94 : vector<2x128xf32>
      %cst_147 = arith.constant 2.49999952 : f32
      %269 = vector.broadcast %cst_147 : f32 to vector<2x128xf32>
      %270 = arith.mulf %268, %269 : vector<2x128xf32>
      %271 = arith.mulf %270, %182 : vector<2x128xf32>
      %272 = arith.addf %266, %271 : vector<2x128xf32>
      %cst_148 = arith.constant 1.24999988 : f32
      %273 = vector.broadcast %cst_148 : f32 to vector<2x128xf32>
      %274 = arith.mulf %72, %273 : vector<2x128xf32>
      %275 = arith.mulf %274, %191 : vector<2x128xf32>
      %cst_149 = arith.constant 0.000000e+00 : f32
      %276 = vector.broadcast %cst_149 : f32 to vector<2x128xf32>
      %277 = arith.subf %276, %78 : vector<2x128xf32>
      %cst_150 = arith.constant 1.25000012 : f32
      %278 = vector.broadcast %cst_150 : f32 to vector<2x128xf32>
      %279 = arith.mulf %277, %278 : vector<2x128xf32>
      %280 = arith.mulf %279, %200 : vector<2x128xf32>
      %281 = arith.addf %275, %280 : vector<2x128xf32>
      %cst_151 = arith.constant 1.25000012 : f32
      %282 = vector.broadcast %cst_151 : f32 to vector<2x128xf32>
      %283 = arith.mulf %74, %282 : vector<2x128xf32>
      %284 = arith.mulf %283, %200 : vector<2x128xf32>
      %cst_152 = arith.constant 0.000000e+00 : f32
      %285 = vector.broadcast %cst_152 : f32 to vector<2x128xf32>
      %286 = arith.subf %285, %80 : vector<2x128xf32>
      %cst_153 = arith.constant 1.25000012 : f32
      %287 = vector.broadcast %cst_153 : f32 to vector<2x128xf32>
      %288 = arith.mulf %286, %287 : vector<2x128xf32>
      %289 = arith.mulf %288, %209 : vector<2x128xf32>
      %290 = arith.addf %284, %289 : vector<2x128xf32>
      %cst_154 = arith.constant 1.25000012 : f32
      %291 = vector.broadcast %cst_154 : f32 to vector<2x128xf32>
      %292 = arith.mulf %76, %291 : vector<2x128xf32>
      %293 = arith.mulf %292, %209 : vector<2x128xf32>
      %cst_155 = arith.constant 0.000000e+00 : f32
      %294 = vector.broadcast %cst_155 : f32 to vector<2x128xf32>
      %295 = arith.subf %294, %82 : vector<2x128xf32>
      %cst_156 = arith.constant 1.250000e+00 : f32
      %296 = vector.broadcast %cst_156 : f32 to vector<2x128xf32>
      %297 = arith.mulf %295, %296 : vector<2x128xf32>
      %298 = arith.mulf %297, %218 : vector<2x128xf32>
      %299 = arith.addf %293, %298 : vector<2x128xf32>
      %cst_157 = arith.constant 1.250000e+00 : f32
      %300 = vector.broadcast %cst_157 : f32 to vector<2x128xf32>
      %301 = arith.mulf %78, %300 : vector<2x128xf32>
      %302 = arith.mulf %301, %218 : vector<2x128xf32>
      %cst_158 = arith.constant 0.000000e+00 : f32
      %303 = vector.broadcast %cst_158 : f32 to vector<2x128xf32>
      %304 = arith.subf %303, %84 : vector<2x128xf32>
      %cst_159 = arith.constant 1.250000e+00 : f32
      %305 = vector.broadcast %cst_159 : f32 to vector<2x128xf32>
      %306 = arith.mulf %304, %305 : vector<2x128xf32>
      %307 = arith.mulf %306, %227 : vector<2x128xf32>
      %308 = arith.addf %302, %307 : vector<2x128xf32>
      %cst_160 = arith.constant 1.250000e+00 : f32
      %309 = vector.broadcast %cst_160 : f32 to vector<2x128xf32>
      %310 = arith.mulf %80, %309 : vector<2x128xf32>
      %311 = arith.mulf %310, %227 : vector<2x128xf32>
      %cst_161 = arith.constant 0.000000e+00 : f32
      %312 = vector.broadcast %cst_161 : f32 to vector<2x128xf32>
      %313 = arith.subf %312, %86 : vector<2x128xf32>
      %cst_162 = arith.constant 1.250000e+00 : f32
      %314 = vector.broadcast %cst_162 : f32 to vector<2x128xf32>
      %315 = arith.mulf %313, %314 : vector<2x128xf32>
      %316 = arith.mulf %315, %236 : vector<2x128xf32>
      %317 = arith.addf %311, %316 : vector<2x128xf32>
      %cst_163 = arith.constant 1.250000e+00 : f32
      %318 = vector.broadcast %cst_163 : f32 to vector<2x128xf32>
      %319 = arith.mulf %82, %318 : vector<2x128xf32>
      %320 = arith.mulf %319, %236 : vector<2x128xf32>
      %cst_164 = arith.constant 0.000000e+00 : f32
      %321 = vector.broadcast %cst_164 : f32 to vector<2x128xf32>
      %322 = arith.subf %321, %88 : vector<2x128xf32>
      %cst_165 = arith.constant 1.250000e+00 : f32
      %323 = vector.broadcast %cst_165 : f32 to vector<2x128xf32>
      %324 = arith.mulf %322, %323 : vector<2x128xf32>
      %325 = arith.mulf %324, %245 : vector<2x128xf32>
      %326 = arith.addf %320, %325 : vector<2x128xf32>
      %cst_166 = arith.constant 1.250000e+00 : f32
      %327 = vector.broadcast %cst_166 : f32 to vector<2x128xf32>
      %328 = arith.mulf %84, %327 : vector<2x128xf32>
      %329 = arith.mulf %328, %245 : vector<2x128xf32>
      %cst_167 = arith.constant 0.000000e+00 : f32
      %330 = vector.broadcast %cst_167 : f32 to vector<2x128xf32>
      %331 = arith.subf %330, %90 : vector<2x128xf32>
      %cst_168 = arith.constant 1.25000012 : f32
      %332 = vector.broadcast %cst_168 : f32 to vector<2x128xf32>
      %333 = arith.mulf %331, %332 : vector<2x128xf32>
      %334 = arith.mulf %333, %254 : vector<2x128xf32>
      %335 = arith.addf %329, %334 : vector<2x128xf32>
      %cst_169 = arith.constant 1.25000012 : f32
      %336 = vector.broadcast %cst_169 : f32 to vector<2x128xf32>
      %337 = arith.mulf %86, %336 : vector<2x128xf32>
      %338 = arith.mulf %337, %254 : vector<2x128xf32>
      %cst_170 = arith.constant 0.000000e+00 : f32
      %339 = vector.broadcast %cst_170 : f32 to vector<2x128xf32>
      %340 = arith.subf %339, %92 : vector<2x128xf32>
      %cst_171 = arith.constant 1.25000012 : f32
      %341 = vector.broadcast %cst_171 : f32 to vector<2x128xf32>
      %342 = arith.mulf %340, %341 : vector<2x128xf32>
      %343 = arith.mulf %342, %263 : vector<2x128xf32>
      %344 = arith.addf %338, %343 : vector<2x128xf32>
      %cst_172 = arith.constant 1.25000012 : f32
      %345 = vector.broadcast %cst_172 : f32 to vector<2x128xf32>
      %346 = arith.mulf %88, %345 : vector<2x128xf32>
      %347 = arith.mulf %346, %263 : vector<2x128xf32>
      %cst_173 = arith.constant 0.000000e+00 : f32
      %348 = vector.broadcast %cst_173 : f32 to vector<2x128xf32>
      %349 = arith.subf %348, %94 : vector<2x128xf32>
      %cst_174 = arith.constant 1.24999988 : f32
      %350 = vector.broadcast %cst_174 : f32 to vector<2x128xf32>
      %351 = arith.mulf %349, %350 : vector<2x128xf32>
      %352 = arith.mulf %351, %272 : vector<2x128xf32>
      %353 = arith.addf %347, %352 : vector<2x128xf32>
      %cst_175 = arith.constant 0.833333313 : f32
      %354 = vector.broadcast %cst_175 : f32 to vector<2x128xf32>
      %355 = arith.mulf %72, %354 : vector<2x128xf32>
      %356 = arith.mulf %355, %281 : vector<2x128xf32>
      %cst_176 = arith.constant 0.000000e+00 : f32
      %357 = vector.broadcast %cst_176 : f32 to vector<2x128xf32>
      %358 = arith.subf %357, %80 : vector<2x128xf32>
      %cst_177 = arith.constant 0.833333373 : f32
      %359 = vector.broadcast %cst_177 : f32 to vector<2x128xf32>
      %360 = arith.mulf %358, %359 : vector<2x128xf32>
      %361 = arith.mulf %360, %290 : vector<2x128xf32>
      %362 = arith.addf %356, %361 : vector<2x128xf32>
      %cst_178 = arith.constant 0.833333373 : f32
      %363 = vector.broadcast %cst_178 : f32 to vector<2x128xf32>
      %364 = arith.mulf %74, %363 : vector<2x128xf32>
      %365 = arith.mulf %364, %290 : vector<2x128xf32>
      %cst_179 = arith.constant 0.000000e+00 : f32
      %366 = vector.broadcast %cst_179 : f32 to vector<2x128xf32>
      %367 = arith.subf %366, %82 : vector<2x128xf32>
      %cst_180 = arith.constant 0.833333373 : f32
      %368 = vector.broadcast %cst_180 : f32 to vector<2x128xf32>
      %369 = arith.mulf %367, %368 : vector<2x128xf32>
      %370 = arith.mulf %369, %299 : vector<2x128xf32>
      %371 = arith.addf %365, %370 : vector<2x128xf32>
      %cst_181 = arith.constant 0.833333373 : f32
      %372 = vector.broadcast %cst_181 : f32 to vector<2x128xf32>
      %373 = arith.mulf %76, %372 : vector<2x128xf32>
      %374 = arith.mulf %373, %299 : vector<2x128xf32>
      %cst_182 = arith.constant 0.000000e+00 : f32
      %375 = vector.broadcast %cst_182 : f32 to vector<2x128xf32>
      %376 = arith.subf %375, %84 : vector<2x128xf32>
      %cst_183 = arith.constant 0.833333313 : f32
      %377 = vector.broadcast %cst_183 : f32 to vector<2x128xf32>
      %378 = arith.mulf %376, %377 : vector<2x128xf32>
      %379 = arith.mulf %378, %308 : vector<2x128xf32>
      %380 = arith.addf %374, %379 : vector<2x128xf32>
      %cst_184 = arith.constant 0.833333313 : f32
      %381 = vector.broadcast %cst_184 : f32 to vector<2x128xf32>
      %382 = arith.mulf %78, %381 : vector<2x128xf32>
      %383 = arith.mulf %382, %308 : vector<2x128xf32>
      %cst_185 = arith.constant 0.000000e+00 : f32
      %384 = vector.broadcast %cst_185 : f32 to vector<2x128xf32>
      %385 = arith.subf %384, %86 : vector<2x128xf32>
      %cst_186 = arith.constant 0.833333313 : f32
      %386 = vector.broadcast %cst_186 : f32 to vector<2x128xf32>
      %387 = arith.mulf %385, %386 : vector<2x128xf32>
      %388 = arith.mulf %387, %317 : vector<2x128xf32>
      %389 = arith.addf %383, %388 : vector<2x128xf32>
      %cst_187 = arith.constant 0.833333313 : f32
      %390 = vector.broadcast %cst_187 : f32 to vector<2x128xf32>
      %391 = arith.mulf %80, %390 : vector<2x128xf32>
      %392 = arith.mulf %391, %317 : vector<2x128xf32>
      %cst_188 = arith.constant 0.000000e+00 : f32
      %393 = vector.broadcast %cst_188 : f32 to vector<2x128xf32>
      %394 = arith.subf %393, %88 : vector<2x128xf32>
      %cst_189 = arith.constant 0.833333313 : f32
      %395 = vector.broadcast %cst_189 : f32 to vector<2x128xf32>
      %396 = arith.mulf %394, %395 : vector<2x128xf32>
      %397 = arith.mulf %396, %326 : vector<2x128xf32>
      %398 = arith.addf %392, %397 : vector<2x128xf32>
      %cst_190 = arith.constant 0.833333313 : f32
      %399 = vector.broadcast %cst_190 : f32 to vector<2x128xf32>
      %400 = arith.mulf %82, %399 : vector<2x128xf32>
      %401 = arith.mulf %400, %326 : vector<2x128xf32>
      %cst_191 = arith.constant 0.000000e+00 : f32
      %402 = vector.broadcast %cst_191 : f32 to vector<2x128xf32>
      %403 = arith.subf %402, %90 : vector<2x128xf32>
      %cst_192 = arith.constant 0.833333373 : f32
      %404 = vector.broadcast %cst_192 : f32 to vector<2x128xf32>
      %405 = arith.mulf %403, %404 : vector<2x128xf32>
      %406 = arith.mulf %405, %335 : vector<2x128xf32>
      %407 = arith.addf %401, %406 : vector<2x128xf32>
      %cst_193 = arith.constant 0.833333373 : f32
      %408 = vector.broadcast %cst_193 : f32 to vector<2x128xf32>
      %409 = arith.mulf %84, %408 : vector<2x128xf32>
      %410 = arith.mulf %409, %335 : vector<2x128xf32>
      %cst_194 = arith.constant 0.000000e+00 : f32
      %411 = vector.broadcast %cst_194 : f32 to vector<2x128xf32>
      %412 = arith.subf %411, %92 : vector<2x128xf32>
      %cst_195 = arith.constant 0.833333373 : f32
      %413 = vector.broadcast %cst_195 : f32 to vector<2x128xf32>
      %414 = arith.mulf %412, %413 : vector<2x128xf32>
      %415 = arith.mulf %414, %344 : vector<2x128xf32>
      %416 = arith.addf %410, %415 : vector<2x128xf32>
      %cst_196 = arith.constant 0.833333373 : f32
      %417 = vector.broadcast %cst_196 : f32 to vector<2x128xf32>
      %418 = arith.mulf %86, %417 : vector<2x128xf32>
      %419 = arith.mulf %418, %344 : vector<2x128xf32>
      %cst_197 = arith.constant 0.000000e+00 : f32
      %420 = vector.broadcast %cst_197 : f32 to vector<2x128xf32>
      %421 = arith.subf %420, %94 : vector<2x128xf32>
      %cst_198 = arith.constant 0.833333313 : f32
      %422 = vector.broadcast %cst_198 : f32 to vector<2x128xf32>
      %423 = arith.mulf %421, %422 : vector<2x128xf32>
      %424 = arith.mulf %423, %353 : vector<2x128xf32>
      %425 = arith.addf %419, %424 : vector<2x128xf32>
      %c2_199 = arith.constant 2 : index
      %426 = arith.index_cast %53 : i32 to index
      %427 = vector.load %arg6[%c2_199, %426] : memref<18x512xf32, #tpu.memory_space<vmem>>, vector<2x128xf32>
      tpu.vector_store %arg6[%c2_199, %426], %362 {strides = array<i32>} : memref<18x512xf32, #tpu.memory_space<vmem>>, vector<2x128xf32>,
      %c4_200 = arith.constant 4 : index
      %428 = arith.index_cast %53 : i32 to index
      %429 = vector.load %arg6[%c4_200, %428] : memref<18x512xf32, #tpu.memory_space<vmem>>, vector<2x128xf32>
      tpu.vector_store %arg6[%c4_200, %428], %371 {strides = array<i32>} : memref<18x512xf32, #tpu.memory_space<vmem>>, vector<2x128xf32>,
      %c6_201 = arith.constant 6 : index
      %430 = arith.index_cast %53 : i32 to index
      %431 = vector.load %arg6[%c6_201, %430] : memref<18x512xf32, #tpu.memory_space<vmem>>, vector<2x128xf32>
      tpu.vector_store %arg6[%c6_201, %430], %380 {strides = array<i32>} : memref<18x512xf32, #tpu.memory_space<vmem>>, vector<2x128xf32>,
      %c8_202 = arith.constant 8 : index
      %432 = arith.index_cast %53 : i32 to index
      %433 = vector.load %arg6[%c8_202, %432] : memref<18x512xf32, #tpu.memory_space<vmem>>, vector<2x128xf32>
      tpu.vector_store %arg6[%c8_202, %432], %389 {strides = array<i32>} : memref<18x512xf32, #tpu.memory_space<vmem>>, vector<2x128xf32>,
      %c10 = arith.constant 10 : index
      %434 = arith.index_cast %53 : i32 to index
      %435 = vector.load %arg6[%c10, %434] : memref<18x512xf32, #tpu.memory_space<vmem>>, vector<2x128xf32>
      tpu.vector_store %arg6[%c10, %434], %398 {strides = array<i32>} : memref<18x512xf32, #tpu.memory_space<vmem>>, vector<2x128xf32>,
      %c12 = arith.constant 12 : index
      %436 = arith.index_cast %53 : i32 to index
      %437 = vector.load %arg6[%c12, %436] : memref<18x512xf32, #tpu.memory_space<vmem>>, vector<2x128xf32>
      tpu.vector_store %arg6[%c12, %436], %407 {strides = array<i32>} : memref<18x512xf32, #tpu.memory_space<vmem>>, vector<2x128xf32>,
      %c14 = arith.constant 14 : index
      %438 = arith.index_cast %53 : i32 to index
      %439 = vector.load %arg6[%c14, %438] : memref<18x512xf32, #tpu.memory_space<vmem>>, vector<2x128xf32>
      tpu.vector_store %arg6[%c14, %438], %416 {strides = array<i32>} : memref<18x512xf32, #tpu.memory_space<vmem>>, vector<2x128xf32>,
      %c16 = arith.constant 16 : index
      %440 = arith.index_cast %53 : i32 to index
      %441 = vector.load %arg6[%c16, %440] : memref<18x512xf32, #tpu.memory_space<vmem>>, vector<2x128xf32>
      tpu.vector_store %arg6[%c16, %440], %425 {strides = array<i32>} : memref<18x512xf32, #tpu.memory_space<vmem>>, vector<2x128xf32>,
    }
    %c4_i32_0 = arith.constant 4 : i32
    %c0 = arith.constant 0 : index
    %c0_1 = arith.constant 0 : index
    %c0_2 = arith.constant 0 : index
    %c0_3 = arith.constant 0 : index
    %2 = vector.load %arg4[%c0, %c0_1, %c0_2, %c0_3] : memref<1x9x4x18xf32, #tpu.memory_space<vmem>>, vector<1x1x4x18xf32>
    %3 = vector.shape_cast %2 : vector<1x1x4x18xf32> to vector<4x18xf32>
    %c0_4 = arith.constant 0 : index
    %c0_5 = arith.constant 0 : index
    %4 = vector.load %arg6[%c0_4, %c0_5] : memref<18x512xf32, #tpu.memory_space<vmem>>, vector<18x384xf32>
    %cst = arith.constant dense<0.000000e+00> : vector<4x384xf32>
    %5 = tpu.matmul %3, %4, %cst {dimension_numbers = #tpu.dot_dimension_numbers<[1], [0], [0], [1], [0, 0, 1, 1], [], []>} : vector<4x18xf32>, vector<18x384xf32>, vector<4x384xf32> -> vector<4x384xf32>
    %c0_6 = arith.constant 0 : index
    %c1 = arith.constant 1 : index
    %c0_7 = arith.constant 0 : index
    %c0_8 = arith.constant 0 : index
    %6 = vector.load %arg4[%c0_6, %c1, %c0_7, %c0_8] : memref<1x9x4x18xf32, #tpu.memory_space<vmem>>, vector<1x1x4x18xf32>
    %7 = vector.shape_cast %6 : vector<1x1x4x18xf32> to vector<4x18xf32>
    %c0_9 = arith.constant 0 : index
    %c1_10 = arith.constant 1 : index
    %8 = vector.load %arg6[%c0_9, %c1_10] : memref<18x512xf32, #tpu.memory_space<vmem>>, vector<18x384xf32>
    %cst_11 = arith.constant dense<0.000000e+00> : vector<4x384xf32>
    %9 = tpu.matmul %7, %8, %cst_11 {dimension_numbers = #tpu.dot_dimension_numbers<[1], [0], [0], [1], [0, 0, 1, 1], [], []>} : vector<4x18xf32>, vector<18x384xf32>, vector<4x384xf32> -> vector<4x384xf32>
    %10 = arith.addf %5, %9 : vector<4x384xf32>
    %c0_12 = arith.constant 0 : index
    %c2 = arith.constant 2 : index
    %c0_13 = arith.constant 0 : index
    %c0_14 = arith.constant 0 : index
    %11 = vector.load %arg4[%c0_12, %c2, %c0_13, %c0_14] : memref<1x9x4x18xf32, #tpu.memory_space<vmem>>, vector<1x1x4x18xf32>
    %12 = vector.shape_cast %11 : vector<1x1x4x18xf32> to vector<4x18xf32>
    %c0_15 = arith.constant 0 : index
    %c2_16 = arith.constant 2 : index
    %13 = vector.load %arg6[%c0_15, %c2_16] : memref<18x512xf32, #tpu.memory_space<vmem>>, vector<18x384xf32>
    %cst_17 = arith.constant dense<0.000000e+00> : vector<4x384xf32>
    %14 = tpu.matmul %12, %13, %cst_17 {dimension_numbers = #tpu.dot_dimension_numbers<[1], [0], [0], [1], [0, 0, 1, 1], [], []>} : vector<4x18xf32>, vector<18x384xf32>, vector<4x384xf32> -> vector<4x384xf32>
    %15 = arith.addf %10, %14 : vector<4x384xf32>
    %c0_18 = arith.constant 0 : index
    %c3 = arith.constant 3 : index
    %c0_19 = arith.constant 0 : index
    %c0_20 = arith.constant 0 : index
    %16 = vector.load %arg4[%c0_18, %c3, %c0_19, %c0_20] : memref<1x9x4x18xf32, #tpu.memory_space<vmem>>, vector<1x1x4x18xf32>
    %17 = vector.shape_cast %16 : vector<1x1x4x18xf32> to vector<4x18xf32>
    %c0_21 = arith.constant 0 : index
    %c18 = arith.constant 18 : index
    %18 = vector.load %arg6[%c0_21, %c18] : memref<18x512xf32, #tpu.memory_space<vmem>>, vector<18x384xf32>
    %cst_22 = arith.constant dense<0.000000e+00> : vector<4x384xf32>
    %19 = tpu.matmul %17, %18, %cst_22 {dimension_numbers = #tpu.dot_dimension_numbers<[1], [0], [0], [1], [0, 0, 1, 1], [], []>} : vector<4x18xf32>, vector<18x384xf32>, vector<4x384xf32> -> vector<4x384xf32>
    %20 = arith.addf %15, %19 : vector<4x384xf32>
    %c0_23 = arith.constant 0 : index
    %c4 = arith.constant 4 : index
    %c0_24 = arith.constant 0 : index
    %c0_25 = arith.constant 0 : index
    %21 = vector.load %arg4[%c0_23, %c4, %c0_24, %c0_25] : memref<1x9x4x18xf32, #tpu.memory_space<vmem>>, vector<1x1x4x18xf32>
    %22 = vector.shape_cast %21 : vector<1x1x4x18xf32> to vector<4x18xf32>
    %c0_26 = arith.constant 0 : index
    %c19 = arith.constant 19 : index
    %23 = vector.load %arg6[%c0_26, %c19] : memref<18x512xf32, #tpu.memory_space<vmem>>, vector<18x384xf32>
    %cst_27 = arith.constant dense<0.000000e+00> : vector<4x384xf32>
    %24 = tpu.matmul %22, %23, %cst_27 {dimension_numbers = #tpu.dot_dimension_numbers<[1], [0], [0], [1], [0, 0, 1, 1], [], []>} : vector<4x18xf32>, vector<18x384xf32>, vector<4x384xf32> -> vector<4x384xf32>
    %25 = arith.addf %20, %24 : vector<4x384xf32>
    %c0_28 = arith.constant 0 : index
    %c5 = arith.constant 5 : index
    %c0_29 = arith.constant 0 : index
    %c0_30 = arith.constant 0 : index
    %26 = vector.load %arg4[%c0_28, %c5, %c0_29, %c0_30] : memref<1x9x4x18xf32, #tpu.memory_space<vmem>>, vector<1x1x4x18xf32>
    %27 = vector.shape_cast %26 : vector<1x1x4x18xf32> to vector<4x18xf32>
    %c0_31 = arith.constant 0 : index
    %c20 = arith.constant 20 : index
    %28 = vector.load %arg6[%c0_31, %c20] : memref<18x512xf32, #tpu.memory_space<vmem>>, vector<18x384xf32>
    %cst_32 = arith.constant dense<0.000000e+00> : vector<4x384xf32>
    %29 = tpu.matmul %27, %28, %cst_32 {dimension_numbers = #tpu.dot_dimension_numbers<[1], [0], [0], [1], [0, 0, 1, 1], [], []>} : vector<4x18xf32>, vector<18x384xf32>, vector<4x384xf32> -> vector<4x384xf32>
    %30 = arith.addf %25, %29 : vector<4x384xf32>
    %c0_33 = arith.constant 0 : index
    %c6 = arith.constant 6 : index
    %c0_34 = arith.constant 0 : index
    %c0_35 = arith.constant 0 : index
    %31 = vector.load %arg4[%c0_33, %c6, %c0_34, %c0_35] : memref<1x9x4x18xf32, #tpu.memory_space<vmem>>, vector<1x1x4x18xf32>
    %32 = vector.shape_cast %31 : vector<1x1x4x18xf32> to vector<4x18xf32>
    %c0_36 = arith.constant 0 : index
    %c36 = arith.constant 36 : index
    %33 = vector.load %arg6[%c0_36, %c36] : memref<18x512xf32, #tpu.memory_space<vmem>>, vector<18x384xf32>
    %cst_37 = arith.constant dense<0.000000e+00> : vector<4x384xf32>
    %34 = tpu.matmul %32, %33, %cst_37 {dimension_numbers = #tpu.dot_dimension_numbers<[1], [0], [0], [1], [0, 0, 1, 1], [], []>} : vector<4x18xf32>, vector<18x384xf32>, vector<4x384xf32> -> vector<4x384xf32>
    %35 = arith.addf %30, %34 : vector<4x384xf32>
    %c0_38 = arith.constant 0 : index
    %c7 = arith.constant 7 : index
    %c0_39 = arith.constant 0 : index
    %c0_40 = arith.constant 0 : index
    %36 = vector.load %arg4[%c0_38, %c7, %c0_39, %c0_40] : memref<1x9x4x18xf32, #tpu.memory_space<vmem>>, vector<1x1x4x18xf32>
    %37 = vector.shape_cast %36 : vector<1x1x4x18xf32> to vector<4x18xf32>
    %c0_41 = arith.constant 0 : index
    %c37 = arith.constant 37 : index
    %38 = vector.load %arg6[%c0_41, %c37] : memref<18x512xf32, #tpu.memory_space<vmem>>, vector<18x384xf32>
    %cst_42 = arith.constant dense<0.000000e+00> : vector<4x384xf32>
    %39 = tpu.matmul %37, %38, %cst_42 {dimension_numbers = #tpu.dot_dimension_numbers<[1], [0], [0], [1], [0, 0, 1, 1], [], []>} : vector<4x18xf32>, vector<18x384xf32>, vector<4x384xf32> -> vector<4x384xf32>
    %40 = arith.addf %35, %39 : vector<4x384xf32>
    %c0_43 = arith.constant 0 : index
    %c8 = arith.constant 8 : index
    %c0_44 = arith.constant 0 : index
    %c0_45 = arith.constant 0 : index
    %41 = vector.load %arg4[%c0_43, %c8, %c0_44, %c0_45] : memref<1x9x4x18xf32, #tpu.memory_space<vmem>>, vector<1x1x4x18xf32>
    %42 = vector.shape_cast %41 : vector<1x1x4x18xf32> to vector<4x18xf32>
    %c0_46 = arith.constant 0 : index
    %c38 = arith.constant 38 : index
    %43 = vector.load %arg6[%c0_46, %c38] : memref<18x512xf32, #tpu.memory_space<vmem>>, vector<18x384xf32>
    %cst_47 = arith.constant dense<0.000000e+00> : vector<4x384xf32>
    %44 = tpu.matmul %42, %43, %cst_47 {dimension_numbers = #tpu.dot_dimension_numbers<[1], [0], [0], [1], [0, 0, 1, 1], [], []>} : vector<4x18xf32>, vector<18x384xf32>, vector<4x384xf32> -> vector<4x384xf32>
    %45 = arith.addf %40, %44 : vector<4x384xf32>
    %c0_48 = arith.constant 0 : index
    %c0_49 = arith.constant 0 : index
    %c0_50 = arith.constant 0 : index
    %c0_51 = arith.constant 0 : index
    %46 = vector.load %arg5[%c0_48, %c0_49, %c0_50, %c0_51] : memref<1x1x4x384xf32, #tpu.memory_space<vmem>>, vector<1x1x4x384xf32>
    %47 = vector.shape_cast %46 : vector<1x1x4x384xf32> to vector<4x384xf32>
    %48 = vector.shape_cast %45 : vector<4x384xf32> to vector<1x1x4x384xf32>
    tpu.vector_store %arg5[%c0_48, %c0_49, %c0_50, %c0_51], %48 {strides = array<i32>} : memref<1x1x4x384xf32, #tpu.memory_space<vmem>>, vector<1x1x4x384xf32>,
    return
  }
  func.func @transform_0(%arg0: i32, %arg1: i32, %arg2: i32) -> (i32, i32, i32, i32) {
    %c0_i32 = arith.constant 0 : i32
    %c0_i32_0 = arith.constant 0 : i32
    %c0_i32_1 = arith.constant 0 : i32
    return %arg1, %arg0, %c0_i32, %c0_i32_0 : i32, i32, i32, i32
  }
  func.func @transform_1(%arg0: i32, %arg1: i32, %arg2: i32) -> (i32, i32, i32, i32) {
    %c0_i32 = arith.constant 0 : i32
    %c0_i32_0 = arith.constant 0 : i32
    %c0_i32_1 = arith.constant 0 : i32
    %c0_i32_2 = arith.constant 0 : i32
    return %arg0, %c0_i32, %c0_i32_0, %c0_i32_1 : i32, i32, i32, i32
  }
  func.func @transform_2(%arg0: i32, %arg1: i32, %arg2: i32) -> (i32, i32, i32, i32) {
    %c0_i32 = arith.constant 0 : i32
    %c0_i32_0 = arith.constant 0 : i32
    return %arg1, %arg0, %c0_i32, %arg2 : i32, i32, i32, i32
  }
}

module attributes {stable_mosaic.version = 11 : i64} {
  func.func @_norm_prelu_kernel(%arg0: i32, %arg1: i32, %arg2: memref<1x8x256xf32, #tpu.memory_space<vmem>>, %arg3: memref<8x1xf32, #tpu.memory_space<vmem>>, %arg4: memref<1x8x256xf32, #tpu.memory_space<vmem>>) attributes {dimension_semantics = [#tpu.dimension_semantics<parallel>, #tpu.dimension_semantics<parallel>], iteration_bounds = array<i64: 2, 1>, scalar_prefetch = 0 : i64, scratch_operands = 0 : i64, tpu.core_type = #tpu.core_type<tc>, window_params = [{transform_indices = @transform_0, window_bounds = array<i64: 1, 8, 256>}, {transform_indices = @transform_1, window_bounds = array<i64: 8, 1>}, {transform_indices = @transform_2, window_bounds = array<i64: 1, 8, 256>}]} {
    %c0 = arith.constant 0 : index
    %c0_0 = arith.constant 0 : index
    %c0_1 = arith.constant 0 : index
    %0 = vector.load %arg2[%c0, %c0_0, %c0_1] : memref<1x8x256xf32, #tpu.memory_space<vmem>>, vector<1x8x256xf32>
    %1 = vector.shape_cast %0 : vector<1x8x256xf32> to vector<8x256xf32>
    %cst = arith.constant dense<0.000000e+00> : vector<8xf32>
    %2 = vector.multi_reduction <add>, %1, %cst [1] : vector<8x256xf32> to vector<8xf32>
    %3 = vector.shape_cast %2 : vector<8xf32> to vector<8x1xf32>
    %cst_2 = arith.constant 3.906250e-03 : f32
    %4 = vector.broadcast %cst_2 : f32 to vector<8x1xf32>
    %5 = arith.mulf %3, %4 : vector<8x1xf32>
    %6 = vector.broadcast %5 : vector<8x1xf32> to vector<8x256xf32>
    %7 = arith.subf %1, %6 : vector<8x256xf32>
    %8 = arith.mulf %7, %7 : vector<8x256xf32>
    %cst_3 = arith.constant dense<0.000000e+00> : vector<8xf32>
    %9 = vector.multi_reduction <add>, %8, %cst_3 [1] : vector<8x256xf32> to vector<8xf32>
    %10 = vector.shape_cast %9 : vector<8xf32> to vector<8x1xf32>
    %cst_4 = arith.constant 3.906250e-03 : f32
    %11 = vector.broadcast %cst_4 : f32 to vector<8x1xf32>
    %12 = arith.mulf %10, %11 : vector<8x1xf32>
    %cst_5 = arith.constant 9.99999974E-6 : f32
    %13 = vector.broadcast %cst_5 : f32 to vector<8x1xf32>
    %14 = arith.addf %12, %13 : vector<8x1xf32>
    %15 = math.rsqrt %14 : vector<8x1xf32>
    %16 = vector.broadcast %15 : vector<8x1xf32> to vector<8x256xf32>
    %17 = arith.mulf %7, %16 : vector<8x256xf32>
    %c0_6 = arith.constant 0 : index
    %c0_7 = arith.constant 0 : index
    %18 = vector.load %arg3[%c0_6, %c0_7] : memref<8x1xf32, #tpu.memory_space<vmem>>, vector<8x1xf32>
    %cst_8 = arith.constant 0.000000e+00 : f32
    %19 = vector.broadcast %cst_8 : f32 to vector<8x256xf32>
    %20 = arith.cmpf oge, %17, %19 : vector<8x256xf32>
    %21 = vector.broadcast %18 : vector<8x1xf32> to vector<8x256xf32>
    %22 = arith.mulf %21, %17 : vector<8x256xf32>
    %23 = arith.select %20, %17, %22 : vector<8x256xi1>, vector<8x256xf32>
    %c0_9 = arith.constant 0 : index
    %c0_10 = arith.constant 0 : index
    %c0_11 = arith.constant 0 : index
    %24 = vector.load %arg4[%c0_9, %c0_10, %c0_11] : memref<1x8x256xf32, #tpu.memory_space<vmem>>, vector<1x8x256xf32>
    %25 = vector.shape_cast %24 : vector<1x8x256xf32> to vector<8x256xf32>
    %26 = vector.shape_cast %23 : vector<8x256xf32> to vector<1x8x256xf32>
    tpu.vector_store %arg4[%c0_9, %c0_10, %c0_11], %26 {strides = array<i32>} : memref<1x8x256xf32, #tpu.memory_space<vmem>>, vector<1x8x256xf32>,
    return
  }
  func.func @transform_0(%arg0: i32, %arg1: i32) -> (i32, i32, i32) {
    %c0_i32 = arith.constant 0 : i32
    %c0_i32_0 = arith.constant 0 : i32
    return %arg0, %arg1, %c0_i32 : i32, i32, i32
  }
  func.func @transform_1(%arg0: i32, %arg1: i32) -> (i32, i32) {
    %c0_i32 = arith.constant 0 : i32
    %c0_i32_0 = arith.constant 0 : i32
    return %arg1, %c0_i32 : i32, i32
  }
  func.func @transform_2(%arg0: i32, %arg1: i32) -> (i32, i32, i32) {
    %c0_i32 = arith.constant 0 : i32
    %c0_i32_0 = arith.constant 0 : i32
    return %arg0, %arg1, %c0_i32 : i32, i32, i32
  }
}

</mosaic_0001>

<llo_original>
// kernel: a_call__.3
$region0: #{a_call__.3}
  #allocation0 [shape = 'u32[]', space=smem, size = 0x4, offset = 0x4, fixed_abs, tag = 'smem constant byte address 0x4 - core index']
  #allocation1 [shape = 'u32[72,128]{1,0:T(1,128)}', space=vmem, size = 0x9000, scoped, tag = 'internal scratch']
  %s0 = inlined_call_operand.vmem [shape: f32[2,8,256], index: 0, kind: input, shape index: {}]
  %s1 = inlined_call_operand.vmem [shape: f32[8,1], index: 1, kind: input, shape index: {}]
  %s2 = inlined_call_operand.vmem [shape: f32[2,8,256], index: 2, kind: output, shape index: {}]
  %s3 = sld [smem:[#allocation0]]
  $region41: #{a_call__.3} parent=0
    _
  %s5 = ssub.s32 1, %s3
  %s6 = scalar_select 0, %s5, %s3
  loop: start=0, step=1, limit=4
  $region2: #{a_call__.3} parent=0 // loop_pre_header
    _
  $region3: #{a_call__.3} parent=0 // loop_header
    %s8 = sphi 0, %s12
    %p9 = scmp.ge.s32.totalorder %s8, 4
    %s15 = sphi 0, %s27
    %s16 = sphi 0, %s23
    %s17 = sphi 0, %s15
    %s18 = sphi 0, %s16
    %s19 = sphi 0, %s17
    %s20 = sphi 0, %s18
    %s32 = sphi 0, %s34
    %s35 = sphi 0, %s32
    %s36 = sphi 0, %s35
    %s52 = sphi 0, %s36
    %s58 = sphi 0, %s60
    %s61 = sphi 0, %s58
    %s62 = sphi 0, %s61
    %s78 = sphi 0, %s62
    %s86 = sphi 0, %s88
    %s89 = sphi 0, %s86
    %s90 = sphi 0, %s89
    %s106 = sphi 0, %s90
  $region4: #{a_call__.3} parent=0 // loop_header_branch
    %11 = sbr.rel (%p9) target = $region8
  $region5: #{a_call__.3} parent=0 // loop_body
    %s13 = ssub.s32 %s8, 1
    %s14 = ssub.s32 %s8, 2
    %s21 = sadd.s32 1, %s16
    %p22 = scmp.ge.s32.totalorder %s21, 1
    %s23 = scalar_select %p22, 0, %s21
    %s24 = sadd.s32 1, %s15
    %s25 = scalar_select %p22, %s24, %s15
    %p26 = scmp.ge.s32.totalorder %s25, 2
    %s27 = scalar_select %p26, 0, %s25
    %s28 = ssub.s32 %s15, %s27
    %s29 = ssub.s32 %s16, %s23
    %s30 = sor.u32 %s28, %s29
    %p31 = scmp.eq.s32.totalorder %s30, 0
    %s33 = sadd.s32 %s32, 1
    %s34 = scalar_select %p31, %s32, %s33
    %p37 = pneg %p31
    %p38 = scmp.eq.s32.totalorder %s8, 1
    %p39 = por %p37, %p38
    %p40 = scmp.ne.s32.totalorder %s32, %s35
    %p41 = scmp.eq.s32.totalorder %s8, 0
    %p42 = por %p40, %p41
    %p43 = scmp.ne.s32.totalorder %s32, %s35
    %p44 = scmp.eq.s32.totalorder %s13, 1
    %p45 = por %p43, %p44
    %p46 = scmp.ne.s32.totalorder %s35, %s36
    %p47 = scmp.eq.s32.totalorder %s13, 0
    %p48 = por %p46, %p47
    %p49 = scmp.ne.s32.totalorder %s35, %s36
    %p50 = scmp.eq.s32.totalorder %s14, 1
    %p51 = por %p49, %p50
    %p53 = scmp.ne.s32.totalorder %s36, %s52
    %p54 = scmp.eq.s32.totalorder %s14, 0
    %p55 = por %p53, %p54
    %s56 = ssub.s32 %s16, %s23
    %p57 = scmp.eq.s32.totalorder %s56, 0
    %s59 = sadd.s32 %s58, 1
    %s60 = scalar_select %p57, %s58, %s59
    %p63 = pneg %p57
    %p64 = scmp.eq.s32.totalorder %s8, 1
    %p65 = por %p63, %p64
    %p66 = scmp.ne.s32.totalorder %s58, %s61
    %p67 = scmp.eq.s32.totalorder %s8, 0
    %p68 = por %p66, %p67
    %p69 = scmp.ne.s32.totalorder %s58, %s61
    %p70 = scmp.eq.s32.totalorder %s13, 1
    %p71 = por %p69, %p70
    %p72 = scmp.ne.s32.totalorder %s61, %s62
    %p73 = scmp.eq.s32.totalorder %s13, 0
    %p74 = por %p72, %p73
    %p75 = scmp.ne.s32.totalorder %s61, %s62
    %p76 = scmp.eq.s32.totalorder %s14, 1
    %p77 = por %p75, %p76
    %p79 = scmp.ne.s32.totalorder %s62, %s78
    %p80 = scmp.eq.s32.totalorder %s14, 0
    %p81 = por %p79, %p80
    %s82 = ssub.s32 %s15, %s27
    %s83 = ssub.s32 %s16, %s23
    %s84 = sor.u32 %s82, %s83
    %p85 = scmp.eq.s32.totalorder %s84, 0
    %s87 = sadd.s32 %s86, 1
    %s88 = scalar_select %p85, %s86, %s87
    %p91 = pneg %p85
    %p92 = scmp.eq.s32.totalorder %s8, 1
    %p93 = por %p91, %p92
    %p94 = scmp.ne.s32.totalorder %s86, %s89
    %p95 = scmp.eq.s32.totalorder %s8, 0
    %p96 = por %p94, %p95
    %p97 = scmp.ne.s32.totalorder %s86, %s89
    %p98 = scmp.eq.s32.totalorder %s13, 1
    %p99 = por %p97, %p98
    %p100 = scmp.ne.s32.totalorder %s89, %s90
    %p101 = scmp.eq.s32.totalorder %s13, 0
    %p102 = por %p100, %p101
    %p103 = scmp.ne.s32.totalorder %s89, %s90
    %p104 = scmp.eq.s32.totalorder %s14, 1
    %p105 = por %p103, %p104
    %p107 = scmp.ne.s32.totalorder %s90, %s106
    %p108 = scmp.eq.s32.totalorder %s14, 0
    %p109 = por %p107, %p108
    %p110 = scmp.le.s32.totalorder 1, %s8
    %p111 = scmp.lt.s32.totalorder %s8, 3
    %p112 = pnand %p110, %p111
    %p113 = pneg %p112
    // Predicated region
    $region9: #{a_call__.3} parent=5 // pred_check
      _
    $region10: #{a_call__.3} parent=5 // pred_check_branch
      %115 = sbr.rel (%p112) target = $region12
    $region11: #{a_call__.3} parent=5 // pred_region
      %s116 = ssub.s32 %s8, 1
      // Predicated region
      $region13: #{a_call__.3} parent=11 // pred_check
        %p117 = pneg %p74
      $region14: #{a_call__.3} parent=11 // pred_check_branch
        %119 = sbr.rel (%p117) target = $region16
      $region15: #{a_call__.3} parent=11 // pred_region
        %p120 = scmp.lt.s32.totalorder %s18, 0
        %s121 = scalar_select %p120, %s18, 0
        %s122 = smul.addr %s121, 8
        %s123 = scalar_lea.vmem %s1, %s122
      $region16: #{a_call__.3} parent=11 // pred_fallthru
        _
    $region12: #{a_call__.3} parent=5 // pred_fallthru
      _
    %p124 = scmp.lt.s32.totalorder %s8, 2
    // Predicated region
    $region17: #{a_call__.3} parent=5 // pred_check
      %p125 = pneg %p124
    $region18: #{a_call__.3} parent=5 // pred_check_branch
      %127 = sbr.rel (%p125) target = $region20
    $region19: #{a_call__.3} parent=5 // pred_region
      // Predicated region
      $region21: #{a_call__.3} parent=19 // pred_check
        %p128 = pneg %p42
      $region22: #{a_call__.3} parent=19 // pred_check_branch
        %130 = sbr.rel (%p128) target = $region24
      $region23: #{a_call__.3} parent=19 // pred_region
        %p131 = scmp.lt.s32.totalorder %s15, 1
        %s132 = scalar_select %p131, %s15, 1
        %p133 = scmp.lt.s32.totalorder %s16, 0
        %s134 = scalar_select %p133, %s16, 0
        %s135 = smul.addr %s134, 2
        %s136 = smul.addr %s132, 2
        %s137 = sadd.s32 %s135, %s136
        %s138 = smul.addr %s137, 8
        %s139 = scalar_lea.vmem %s0, %s138
      $region24: #{a_call__.3} parent=19 // pred_fallthru
        _
    $region20: #{a_call__.3} parent=5 // pred_fallthru
      _
    %p140 = scmp.le.s32.totalorder 1, %s8
    %p141 = scmp.lt.s32.totalorder %s8, 3
    %p142 = pnand %p140, %p141
    %p143 = pneg %p142
    // Predicated region
    $region25: #{a_call__.3} parent=5 // pred_check
      _
    $region26: #{a_call__.3} parent=5 // pred_check_branch
      %145 = sbr.rel (%p142) target = $region28
    $region27: #{a_call__.3} parent=5 // pred_region
      %s146 = ssub.s32 %s8, 1
      %p147 = scmp.lt.s32.totalorder %s17, 1
      %s148 = scalar_select %p147, %s17, 1
      %p149 = scmp.lt.s32.totalorder %s18, 0
      %s150 = scalar_select %p149, %s18, 0
      %s151 = smul.addr %s150, 2
      %s152 = smul.addr %s148, 2
      %s153 = sadd.s32 %s151, %s152
      %s154 = smul.addr %s153, 8
      %s155 = scalar_lea.vmem %s0, %s154
      %p156 = pneg %p48
      %p157 = pneg %p45
      %p158 = scmp.lt.s32.totalorder %s18, 0
      %s159 = scalar_select %p158, %s18, 0
      %s160 = smul.addr %s159, 8
      %s161 = scalar_lea.vmem %s1, %s160
      %p162 = pneg %p74
      %p163 = pneg %p71
      %p164 = pneg %p102
      %p165 = pneg %p99
      %p166 = scmp.lt.s32.totalorder %s17, 1
      %s167 = scalar_select %p166, %s17, 1
      %p168 = scmp.lt.s32.totalorder %s18, 0
      %s169 = scalar_select %p168, %s18, 0
      %s170 = smul.addr %s169, 2
      %s171 = smul.addr %s167, 2
      %s172 = sadd.s32 %s170, %s171
      %s173 = smul.addr %s172, 8
      %s174 = scalar_lea.vmem %s2, %s173
      %p175 = scmp.lt.s32.totalorder %s17, 1
      %s176 = scalar_select %p175, %s17, 1
      %p177 = scmp.lt.s32.totalorder %s18, 0
      %s178 = scalar_select %p177, %s18, 0
      %s179 = smul.addr %s178, 2
      %s180 = smul.addr %s176, 2
      %s181 = sadd.s32 %s179, %s180
      %s182 = smul.addr %s181, 8
      %s183 = scalar_lea.vmem %s0, %s182
      %p184 = scmp.lt.s32.totalorder %s18, 0
      %s185 = scalar_select %p184, %s18, 0
      %s186 = smul.addr %s185, 8
      %s187 = scalar_lea.vmem %s1, %s186
      %p188 = scmp.lt.s32.totalorder %s17, 1
      %s189 = scalar_select %p188, %s17, 1
      %p190 = scmp.lt.s32.totalorder %s18, 0
      %s191 = scalar_select %p190, %s18, 0
      %s192 = smul.addr %s191, 2
      %s193 = smul.addr %s189, 2
      %s194 = sadd.s32 %s192, %s193
      %s195 = smul.addr %s194, 8
      %s196 = scalar_lea.vmem %s2, %s195
      %v197 = vld [vmem:[%s183] sm:$0xff]
      %v198 = vld [vmem:[%s183 + $0x8] sm:$0xff]
      %v199 = vadd.f32 %v197, %v198
      %200 = vadd.xlane.f32.xlu0 %v199
      %v201 = vpop.xlane.xlu0 %200
      %v202 = vmul.f32 %v201, 0.00390625
      %v203 = vsub.f32 %v197, %v202
      %v204 = vsub.f32 %v198, %v202
      %v205 = vmul.f32 %v203, %v203
      %v206 = vmul.f32 %v204, %v204
      %v207 = vadd.f32 %v205, %v206
      %208 = vadd.xlane.f32.xlu0 %v207
      %v209 = vpop.xlane.xlu0 %208
      %v210 = vmul.f32 %v209, 0.00390625
      %v211 = vadd.f32 %v210, 1e-05
      %v212 = vrsqrt.pop %v211
      %v213 = vmul.f32 %v212, %v211
      %v214 = vmul.f32 %v213, %v212
      %v215 = vmul.f32 0.5, %v214
      %v216 = vsub.f32 1.5, %v215
      %v217 = vmul.f32 %v212, %v216
      %vm218 = vweird.f32 %v211
      %vm219 = vweird.f32 %v212
      %vm220 = vmor %vm218, %vm219
      %v221 = vsel %vm220, %v212, %v217
      %v222 = vmul.f32 %v203, %v221
      %v223 = vmul.f32 %v204, %v221
      %v224 = vld [vmem:[%s187] sm:$0xff]
      %vm225 = vcmp.ge.f32.partialorder %v222, 0.0
      %vm226 = vcmp.ge.f32.partialorder %v223, 0.0
      %228 = vset.pattern.permute.xlu0 0
      %229 = vperm.xlu0 %228, %v224
      %v230 = vpop.permute.xlu0 %229
      %v232 = vmul.f32 %v230, %v222
      %v233 = vmul.f32 %v230, %v223
      %v234 = vsel %vm225, %v222, %v232
      %v235 = vsel %vm226, %v223, %v233
      %236 = vst [vmem:[%s196] sm:$0xff] %v234
      %237 = vst [vmem:[%s196 + $0x8] sm:$0xff] %v235
      %p238 = scmp.lt.s32.totalorder %s17, 1
      %s239 = scalar_select %p238, %s17, 1
      %p240 = scmp.lt.s32.totalorder %s18, 0
      %s241 = scalar_select %p240, %s18, 0
      %s242 = smul.addr %s241, 2
      %s243 = smul.addr %s239, 2
      %s244 = sadd.s32 %s242, %s243
      %s245 = smul.addr %s244, 8
      %s246 = scalar_lea.vmem %s2, %s245
      // Predicated region
      $region29: #{a_call__.3} parent=27 // pred_check
        %p247 = pneg %p99
      $region30: #{a_call__.3} parent=27 // pred_check_branch
        %249 = sbr.rel (%p247) target = $region32
      $region31: #{a_call__.3} parent=27 // pred_region
        _
      $region32: #{a_call__.3} parent=27 // pred_fallthru
        _
    $region28: #{a_call__.3} parent=5 // pred_fallthru
      _
    %p250 = scmp.le.s32.totalorder 2, %s8
    // Predicated region
    $region33: #{a_call__.3} parent=5 // pred_check
      %p251 = pneg %p250
    $region34: #{a_call__.3} parent=5 // pred_check_branch
      %253 = sbr.rel (%p251) target = $region36
    $region35: #{a_call__.3} parent=5 // pred_region
      %s254 = ssub.s32 %s8, 2
      // Predicated region
      $region37: #{a_call__.3} parent=35 // pred_check
        %p255 = pneg %p105
      $region38: #{a_call__.3} parent=35 // pred_check_branch
        %257 = sbr.rel (%p255) target = $region40
      $region39: #{a_call__.3} parent=35 // pred_region
        %p258 = scmp.lt.s32.totalorder %s19, 1
        %s259 = scalar_select %p258, %s19, 1
        %p260 = scmp.lt.s32.totalorder %s20, 0
        %s261 = scalar_select %p260, %s20, 0
        %s262 = smul.addr %s261, 2
        %s263 = smul.addr %s259, 2
        %s264 = sadd.s32 %s262, %s263
        %s265 = smul.addr %s264, 8
        %s266 = scalar_lea.vmem %s2, %s265
      $region40: #{a_call__.3} parent=35 // pred_fallthru
        _
    $region36: #{a_call__.3} parent=5 // pred_fallthru
      _
  $region6: #{a_call__.3} parent=0 // loop_footer
    %s12 = sadd.s32 1, %s8
  $region7: #{a_call__.3} parent=0 // loop_footer_branch
    %7 = sbr.rel target = $region3
  $region8: #{a_call__.3} parent=0 // loop_exit
    _

// kernel: a_call__.2
$region0: #{a_call__.2}
  #allocation0 [shape = 'u32[]', space=smem, size = 0x4, offset = 0x4, fixed_abs, tag = 'smem constant byte address 0x4 - core index']
  #allocation1 [shape = 'u32[72,128]{1,0:T(1,128)}', space=vmem, size = 0x9000, scoped, tag = 'internal scratch']
  #allocation2 [shape = 'f32[18,512]{1,0:T(8,128)}', space=vmem, size = 0xc000, scoped, tag = 'scratch operand']
  %s0 = inlined_call_operand.vmem [shape: f32[2,2,2,512], index: 0, kind: input, shape index: {}]
  %s1 = inlined_call_operand.vmem [shape: f32[2,9,4,18], index: 1, kind: input, shape index: {}]
  %s2 = inlined_call_operand.vmem [shape: f32[2,2,4,384], index: 2, kind: output, shape index: {}]
  %s3 = sld [smem:[#allocation0]]
  $region48: #{a_call__.2} parent=0
    _
  %s5 = ssub.s32 1, %s3
  %s6 = scalar_select 0, %s5, %s3
  loop: start=0, step=1, limit=6
  $region2: #{a_call__.2} parent=0 // loop_pre_header
    _
  $region3: #{a_call__.2} parent=0 // loop_header
    %s8 = sphi 0, %s12
    %p9 = scmp.ge.s32.totalorder %s8, 6
    %s15 = sphi 0, %s34
    %s16 = sphi 0, %s30
    %s17 = sphi 0, %s26
    %s18 = sphi 0, %s15
    %s19 = sphi 0, %s16
    %s20 = sphi 0, %s17
    %s21 = sphi 0, %s18
    %s22 = sphi 0, %s19
    %s23 = sphi 0, %s20
    %s39 = sphi 0, %s41
    %s42 = sphi 0, %s39
    %s43 = sphi 0, %s42
    %s59 = sphi 0, %s43
    %s65 = sphi 0, %s67
    %s68 = sphi 0, %s65
    %s69 = sphi 0, %s68
    %s85 = sphi 0, %s69
    %s95 = sphi 0, %s97
    %s98 = sphi 0, %s95
    %s99 = sphi 0, %s98
    %s115 = sphi 0, %s99
  $region4: #{a_call__.2} parent=0 // loop_header_branch
    %11 = sbr.rel (%p9) target = $region8
  $region5: #{a_call__.2} parent=0 // loop_body
    %s13 = ssub.s32 %s8, 1
    %s14 = ssub.s32 %s8, 2
    %s24 = sadd.s32 1, %s17
    %p25 = scmp.ge.s32.totalorder %s24, 1
    %s26 = scalar_select %p25, 0, %s24
    %s27 = sadd.s32 1, %s16
    %s28 = scalar_select %p25, %s27, %s16
    %p29 = scmp.ge.s32.totalorder %s28, 2
    %s30 = scalar_select %p29, 0, %s28
    %s31 = sadd.s32 1, %s15
    %s32 = scalar_select %p29, %s31, %s15
    %p33 = scmp.ge.s32.totalorder %s32, 2
    %s34 = scalar_select %p33, 0, %s32
    %s35 = ssub.s32 %s16, %s30
    %s36 = ssub.s32 %s15, %s34
    %s37 = sor.u32 %s35, %s36
    %p38 = scmp.eq.s32.totalorder %s37, 0
    %s40 = sadd.s32 %s39, 1
    %s41 = scalar_select %p38, %s39, %s40
    %p44 = pneg %p38
    %p45 = scmp.eq.s32.totalorder %s8, 3
    %p46 = por %p44, %p45
    %p47 = scmp.ne.s32.totalorder %s39, %s42
    %p48 = scmp.eq.s32.totalorder %s8, 0
    %p49 = por %p47, %p48
    %p50 = scmp.ne.s32.totalorder %s39, %s42
    %p51 = scmp.eq.s32.totalorder %s13, 3
    %p52 = por %p50, %p51
    %p53 = scmp.ne.s32.totalorder %s42, %s43
    %p54 = scmp.eq.s32.totalorder %s13, 0
    %p55 = por %p53, %p54
    %p56 = scmp.ne.s32.totalorder %s42, %s43
    %p57 = scmp.eq.s32.totalorder %s14, 3
    %p58 = por %p56, %p57
    %p60 = scmp.ne.s32.totalorder %s43, %s59
    %p61 = scmp.eq.s32.totalorder %s14, 0
    %p62 = por %p60, %p61
    %s63 = ssub.s32 %s15, %s34
    %p64 = scmp.eq.s32.totalorder %s63, 0
    %s66 = sadd.s32 %s65, 1
    %s67 = scalar_select %p64, %s65, %s66
    %p70 = pneg %p64
    %p71 = scmp.eq.s32.totalorder %s8, 3
    %p72 = por %p70, %p71
    %p73 = scmp.ne.s32.totalorder %s65, %s68
    %p74 = scmp.eq.s32.totalorder %s8, 0
    %p75 = por %p73, %p74
    %p76 = scmp.ne.s32.totalorder %s65, %s68
    %p77 = scmp.eq.s32.totalorder %s13, 3
    %p78 = por %p76, %p77
    %p79 = scmp.ne.s32.totalorder %s68, %s69
    %p80 = scmp.eq.s32.totalorder %s13, 0
    %p81 = por %p79, %p80
    %p82 = scmp.ne.s32.totalorder %s68, %s69
    %p83 = scmp.eq.s32.totalorder %s14, 3
    %p84 = por %p82, %p83
    %p86 = scmp.ne.s32.totalorder %s69, %s85
    %p87 = scmp.eq.s32.totalorder %s14, 0
    %p88 = por %p86, %p87
    %s89 = ssub.s32 %s16, %s30
    %s90 = ssub.s32 %s15, %s34
    %s91 = sor.u32 %s89, %s90
    %s92 = ssub.s32 %s17, %s26
    %s93 = sor.u32 %s91, %s92
    %p94 = scmp.eq.s32.totalorder %s93, 0
    %s96 = sadd.s32 %s95, 1
    %s97 = scalar_select %p94, %s95, %s96
    %p100 = pneg %p94
    %p101 = scmp.eq.s32.totalorder %s8, 3
    %p102 = por %p100, %p101
    %p103 = scmp.ne.s32.totalorder %s95, %s98
    %p104 = scmp.eq.s32.totalorder %s8, 0
    %p105 = por %p103, %p104
    %p106 = scmp.ne.s32.totalorder %s95, %s98
    %p107 = scmp.eq.s32.totalorder %s13, 3
    %p108 = por %p106, %p107
    %p109 = scmp.ne.s32.totalorder %s98, %s99
    %p110 = scmp.eq.s32.totalorder %s13, 0
    %p111 = por %p109, %p110
    %p112 = scmp.ne.s32.totalorder %s98, %s99
    %p113 = scmp.eq.s32.totalorder %s14, 3
    %p114 = por %p112, %p113
    %p116 = scmp.ne.s32.totalorder %s99, %s115
    %p117 = scmp.eq.s32.totalorder %s14, 0
    %p118 = por %p116, %p117
    %p119 = scmp.le.s32.totalorder 1, %s8
    %p120 = scmp.lt.s32.totalorder %s8, 5
    %p121 = pnand %p119, %p120
    %p122 = pneg %p121
    // Predicated region
    $region9: #{a_call__.2} parent=5 // pred_check
      _
    $region10: #{a_call__.2} parent=5 // pred_check_branch
      %124 = sbr.rel (%p121) target = $region12
    $region11: #{a_call__.2} parent=5 // pred_region
      %s125 = ssub.s32 %s8, 1
    $region12: #{a_call__.2} parent=5 // pred_fallthru
      _
    %p126 = scmp.lt.s32.totalorder %s8, 4
    // Predicated region
    $region13: #{a_call__.2} parent=5 // pred_check
      %p127 = pneg %p126
    $region14: #{a_call__.2} parent=5 // pred_check_branch
      %129 = sbr.rel (%p127) target = $region16
    $region15: #{a_call__.2} parent=5 // pred_region
      // Predicated region
      $region17: #{a_call__.2} parent=15 // pred_check
        %p130 = pneg %p49
      $region18: #{a_call__.2} parent=15 // pred_check_branch
        %132 = sbr.rel (%p130) target = $region20
      $region19: #{a_call__.2} parent=15 // pred_region
        %p133 = scmp.lt.s32.totalorder %s16, 1
        %s134 = scalar_select %p133, %s16, 1
        %p135 = scmp.lt.s32.totalorder %s15, 1
        %s136 = scalar_select %p135, %s15, 1
        %s137 = smul.addr %s136, 4
        %s138 = smul.addr %s134, 8
        %s139 = sadd.s32 %s137, %s138
        %s140 = smul.addr %s139, 2
        %s141 = scalar_lea.vmem %s0, %s140
      $region20: #{a_call__.2} parent=15 // pred_fallthru
        _
      // Predicated region
      $region21: #{a_call__.2} parent=15 // pred_check
        %p142 = pneg %p75
      $region22: #{a_call__.2} parent=15 // pred_check_branch
        %144 = sbr.rel (%p142) target = $region24
      $region23: #{a_call__.2} parent=15 // pred_region
        %p145 = scmp.lt.s32.totalorder %s15, 1
        %s146 = scalar_select %p145, %s15, 1
        %s147 = smul.addr %s146, 9
        %s148 = smul.addr %s147, 4
        %s149 = scalar_lea.vmem %s1, %s148
      $region24: #{a_call__.2} parent=15 // pred_fallthru
        _
    $region16: #{a_call__.2} parent=5 // pred_fallthru
      _
    %p150 = scmp.le.s32.totalorder 1, %s8
    %p151 = scmp.lt.s32.totalorder %s8, 5
    %p152 = pnand %p150, %p151
    %p153 = pneg %p152
    // Predicated region
    $region25: #{a_call__.2} parent=5 // pred_check
      _
    $region26: #{a_call__.2} parent=5 // pred_check_branch
      %155 = sbr.rel (%p152) target = $region28
    $region27: #{a_call__.2} parent=5 // pred_region
      %s156 = ssub.s32 %s8, 1
      %p157 = scmp.lt.s32.totalorder %s19, 1
      %s158 = scalar_select %p157, %s19, 1
      %p159 = scmp.lt.s32.totalorder %s18, 1
      %s160 = scalar_select %p159, %s18, 1
      %s161 = smul.addr %s160, 4
      %s162 = smul.addr %s158, 8
      %s163 = sadd.s32 %s161, %s162
      %s164 = smul.addr %s163, 2
      %s165 = scalar_lea.vmem %s0, %s164
      %p166 = pneg %p55
      %p167 = pneg %p52
      %p168 = scmp.lt.s32.totalorder %s18, 1
      %s169 = scalar_select %p168, %s18, 1
      %s170 = smul.addr %s169, 9
      %s171 = smul.addr %s170, 4
      %s172 = scalar_lea.vmem %s1, %s171
      %p173 = pneg %p81
      %p174 = pneg %p78
      %p175 = pneg %p111
      %p176 = pneg %p108
      %s177 = smul.u32 3, %s20
      %p178 = scmp.lt.s32.totalorder %s19, 1
      %s179 = scalar_select %p178, %s19, 1
      %p180 = scmp.lt.s32.totalorder %s18, 1
      %s181 = scalar_select %p180, %s18, 1
      %p182 = scmp.lt.s32.totalorder %s177, 2
      %s183 = scalar_select %p182, %s177, 2
      %s184 = smul.addr %s181, 3
      %s185 = sadd.s32 %s183, %s184
      %s186 = smul.addr %s179, 6
      %s187 = sadd.s32 %s185, %s186
      %s188 = smul.addr %s187, 4
      %s189 = scalar_lea.vmem %s2, %s188
      %p190 = scmp.lt.s32.totalorder %s19, 1
      %s191 = scalar_select %p190, %s19, 1
      %p192 = scmp.lt.s32.totalorder %s18, 1
      %s193 = scalar_select %p192, %s18, 1
      %s194 = smul.addr %s193, 4
      %s195 = smul.addr %s191, 8
      %s196 = sadd.s32 %s194, %s195
      %s197 = smul.addr %s196, 2
      %s198 = scalar_lea.vmem %s0, %s197
      %p199 = scmp.lt.s32.totalorder %s18, 1
      %s200 = scalar_select %p199, %s18, 1
      %s201 = smul.addr %s200, 9
      %s202 = smul.addr %s201, 4
      %s203 = scalar_lea.vmem %s1, %s202
      %s204 = smul.u32 3, %s20
      %p205 = scmp.lt.s32.totalorder %s19, 1
      %s206 = scalar_select %p205, %s19, 1
      %p207 = scmp.lt.s32.totalorder %s18, 1
      %s208 = scalar_select %p207, %s18, 1
      %p209 = scmp.lt.s32.totalorder %s204, 2
      %s210 = scalar_select %p209, %s204, 2
      %s211 = smul.addr %s208, 3
      %s212 = sadd.s32 %s210, %s211
      %s213 = smul.addr %s206, 6
      %s214 = sadd.s32 %s212, %s213
      %s215 = smul.addr %s214, 4
      %s216 = scalar_lea.vmem %s2, %s215
      %s217 = smul.u32 3, %s20
      %s218 = smul.u32 %s20, 384
      loop: start=0, step=1, limit=4
      $region29: #{a_call__.2} parent=27 // loop_pre_header
        _
      $region30: #{a_call__.2} parent=27 // loop_header
        %s220 = sphi 0, %s224
        %p221 = scmp.ge.s32.totalorder %s220, 4
      $region31: #{a_call__.2} parent=27 // loop_header_branch
        %223 = sbr.rel (%p221) target = $region35
      $region32: #{a_call__.2} parent=27 // loop_body
        %s225 = smul.u32 %s220, 128
        %s226 = sadd.s32 %s218, %s225
        %s227 = sshra.s32 %s226, 7
        %s228 = sand.u32 %s226, 127
        %s229 = smul.addr %s227, 2
        %s230 = scalar_lea.vmem %s198, %s229
        %v231 = vld [vmem:[%s230] sm:$0x3]
        %v232 = vmul.f32 %v231, 0.5
        %v233 = vmul.f32 %v231, 0.70710677
        %v234 = vmul.f32 %v233, %v233
        %v235 = vmin.f32 16.0, %v234
        %v236 = vmul.f32 %v235, 2.1237322e-06
        %v237 = vadd.f32 %v236, 0.00028619796
        %v238 = vmul.f32 %v235, %v237
        %v239 = vadd.f32 %v238, 0.0036580483
        %v240 = vmul.f32 %v235, %v239
        %v241 = vadd.f32 %v240, 0.05243302
        %v242 = vmul.f32 %v235, %v241
        %v243 = vadd.f32 %v242, 0.18741608
        %v244 = vmul.f32 %v235, %v243
        %v245 = vadd.f32 %v244, 1.1283791
        %v246 = vmul.f32 %v233, %v245
        %v247 = vmul.f32 %v235, 3.8918573e-05
        %v248 = vadd.f32 %v247, 0.001143296
        %v249 = vmul.f32 %v235, %v248
        %v250 = vadd.f32 %v249, 0.014752088
        %v251 = vmul.f32 %v235, %v250
        %v252 = vadd.f32 %v251, 0.112945676
        %v253 = vmul.f32 %v235, %v252
        %v254 = vadd.f32 %v253, 0.4994258
        %v255 = vmul.f32 %v235, %v254
        %v256 = vadd.f32 %v255, 1.0
        %v257 = vrcp.pop %v256
        %v258 = vmul.f32 %v256, %v257
        %v259 = vsub.f32 1.0, %v258
        %v260 = vmul.f32 %v257, %v259
        %v261 = vadd.f32 %v257, %v260
        %vm262 = vweird.f32 %v256
        %vm263 = vweird.f32 %v257
        %vm264 = vmor %vm262, %vm263
        %v265 = vsel %vm264, %v257, %v261
        %v266 = vand.u32 2147483647, %v256
        %vm267 = vcmp.eq.f32.partialorder %v266, 8.507059e+37
        %v268 = vand.u32 %v256, 2147483648
        %v269 = vor.u32 1.1754944e-38, %v268
        %v270 = vsel %vm267, %v269, %v265
        %v271 = vmul.f32 %v246, %v270
        %v272 = vmin.f32 %v271, 1.0
        %v273 = vmax.f32 %v272, -1.0
        %v274 = vadd.f32 %v273, 1.0
        %v275 = vmul.f32 %v232, %v274
        %vm276 = vcmp.gt.f32.partialorder %v231, -5000.0
        %v277 = vsel %vm276, %v275, 0.0
        %s278 = sshra.s32 %s225, 7
        %s279 = sand.u32 %s225, 127
        %s280 = smul.addr %s278, 8
        %s281 = scalar_lea.vmem [#allocation2], %s280
        %282 = vst [vmem:[%s281] sm:$0x3] %v277
        %v283 = vsub.f32 %v231, -2.2
        %v284 = vsub.f32 %v231, -1.8
        %v285 = vsub.f32 %v231, -1.4
        %v286 = vsub.f32 %v231, -1.0
        %v287 = vsub.f32 %v231, -0.6
        %v288 = vsub.f32 %v231, -0.2
        %v289 = vsub.f32 %v231, 0.2
        %v290 = vsub.f32 %v231, 0.6
        %v291 = vsub.f32 %v231, 1.0
        %v292 = vsub.f32 %v231, 1.4
        %v293 = vsub.f32 %v231, 1.8
        %v294 = vsub.f32 %v231, 2.2
        %vm295 = vcmp.ge.f32.partialorder %v283, 0.0
        %vm296 = vcmp.lt.f32.partialorder %v284, 0.0
        %vm297 = vmand %vm295, %vm296
        %v298 = vsel %vm297, 1.0, 0.0
        %vm299 = vcmp.ge.f32.partialorder %v284, 0.0
        %vm300 = vcmp.lt.f32.partialorder %v285, 0.0
        %vm301 = vmand %vm299, %vm300
        %v302 = vsel %vm301, 1.0, 0.0
        %vm303 = vcmp.ge.f32.partialorder %v285, 0.0
        %vm304 = vcmp.lt.f32.partialorder %v286, 0.0
        %vm305 = vmand %vm303, %vm304
        %v306 = vsel %vm305, 1.0, 0.0
        %vm307 = vcmp.ge.f32.partialorder %v286, 0.0
        %vm308 = vcmp.lt.f32.partialorder %v287, 0.0
        %vm309 = vmand %vm307, %vm308
        %v310 = vsel %vm309, 1.0, 0.0
        %vm311 = vcmp.ge.f32.partialorder %v287, 0.0
        %vm312 = vcmp.lt.f32.partialorder %v288, 0.0
        %vm313 = vmand %vm311, %vm312
        %v314 = vsel %vm313, 1.0, 0.0
        %vm315 = vcmp.ge.f32.partialorder %v288, 0.0
        %vm316 = vcmp.lt.f32.partialorder %v289, 0.0
        %vm317 = vmand %vm315, %vm316
        %v318 = vsel %vm317, 1.0, 0.0
        %vm319 = vcmp.ge.f32.partialorder %v289, 0.0
        %vm320 = vcmp.lt.f32.partialorder %v290, 0.0
        %vm321 = vmand %vm319, %vm320
        %v322 = vsel %vm321, 1.0, 0.0
        %vm323 = vcmp.ge.f32.partialorder %v290, 0.0
        %vm324 = vcmp.lt.f32.partialorder %v291, 0.0
        %vm325 = vmand %vm323, %vm324
        %v326 = vsel %vm325, 1.0, 0.0
        %vm327 = vcmp.ge.f32.partialorder %v291, 0.0
        %vm328 = vcmp.lt.f32.partialorder %v292, 0.0
        %vm329 = vmand %vm327, %vm328
        %v330 = vsel %vm329, 1.0, 0.0
        %vm331 = vcmp.ge.f32.partialorder %v292, 0.0
        %vm332 = vcmp.lt.f32.partialorder %v293, 0.0
        %vm333 = vmand %vm331, %vm332
        %v334 = vsel %vm333, 1.0, 0.0
        %vm335 = vcmp.ge.f32.partialorder %v293, 0.0
        %vm336 = vcmp.lt.f32.partialorder %v294, 0.0
        %vm337 = vmand %vm335, %vm336
        %v338 = vsel %vm337, 1.0, 0.0
        %v339 = vmul.f32 %v283, 2.4999995
        %v340 = vmul.f32 %v339, %v298
        %v341 = vsub.f32 0.0, %v285
        %v342 = vmul.f32 %v341, 2.5000002
        %v343 = vmul.f32 %v342, %v302
        %v344 = vadd.f32 %v340, %v343
        %v345 = vmul.f32 %v284, 2.5000002
        %v346 = vmul.f32 %v345, %v302
        %v347 = vsub.f32 0.0, %v286
        %v348 = vmul.f32 %v347, 2.5000002
        %v349 = vmul.f32 %v348, %v306
        %v350 = vadd.f32 %v346, %v349
        %v351 = vmul.f32 %v285, 2.5000002
        %v352 = vmul.f32 %v351, %v306
        %v353 = vsub.f32 0.0, %v287
        %v354 = vmul.f32 %v353, 2.5000002
        %v355 = vmul.f32 %v354, %v310
        %v356 = vadd.f32 %v352, %v355
        %v357 = vmul.f32 %v286, 2.5000002
        %v358 = vmul.f32 %v357, %v310
        %v359 = vsub.f32 0.0, %v288
        %v360 = vmul.f32 %v359, 2.4999998
        %v361 = vmul.f32 %v360, %v314
        %v362 = vadd.f32 %v358, %v361
        %v363 = vmul.f32 %v287, 2.4999998
        %v364 = vmul.f32 %v363, %v314
        %v365 = vsub.f32 0.0, %v289
        %v366 = vmul.f32 %v365, 2.5
        %v367 = vmul.f32 %v366, %v318
        %v368 = vadd.f32 %v364, %v367
        %v369 = vmul.f32 %v288, 2.5
        %v370 = vmul.f32 %v369, %v318
        %v371 = vsub.f32 0.0, %v290
        %v372 = vmul.f32 %v371, 2.4999998
        %v373 = vmul.f32 %v372, %v322
        %v374 = vadd.f32 %v370, %v373
        %v375 = vmul.f32 %v289, 2.4999998
        %v376 = vmul.f32 %v375, %v322
        %v377 = vsub.f32 0.0, %v291
        %v378 = vmul.f32 %v377, 2.5000002
        %v379 = vmul.f32 %v378, %v326
        %v380 = vadd.f32 %v376, %v379
        %v381 = vmul.f32 %v290, 2.5000002
        %v382 = vmul.f32 %v381, %v326
        %v383 = vsub.f32 0.0, %v292
        %v384 = vmul.f32 %v383, 2.5000002
        %v385 = vmul.f32 %v384, %v330
        %v386 = vadd.f32 %v382, %v385
        %v387 = vmul.f32 %v291, 2.5000002
        %v388 = vmul.f32 %v387, %v330
        %v389 = vsub.f32 0.0, %v293
        %v390 = vmul.f32 %v389, 2.5000002
        %v391 = vmul.f32 %v390, %v334
        %v392 = vadd.f32 %v388, %v391
        %v393 = vmul.f32 %v292, 2.5000002
        %v394 = vmul.f32 %v393, %v334
        %v395 = vsub.f32 0.0, %v294
        %v396 = vmul.f32 %v395, 2.4999995
        %v397 = vmul.f32 %v396, %v338
        %v398 = vadd.f32 %v394, %v397
        %v399 = vmul.f32 %v283, 1.2499999
        %v400 = vmul.f32 %v399, %v344
        %v401 = vmul.f32 %v347, 1.2500001
        %v402 = vmul.f32 %v401, %v350
        %v403 = vadd.f32 %v400, %v402
        %v404 = vmul.f32 %v284, 1.2500001
        %v405 = vmul.f32 %v404, %v350
        %v406 = vmul.f32 %v353, 1.2500001
        %v407 = vmul.f32 %v406, %v356
        %v408 = vadd.f32 %v405, %v407
        %v409 = vmul.f32 %v285, 1.2500001
        %v410 = vmul.f32 %v409, %v356
        %v411 = vmul.f32 %v359, 1.25
        %v412 = vmul.f32 %v411, %v362
        %v413 = vadd.f32 %v410, %v412
        %v414 = vmul.f32 %v286, 1.25
        %v415 = vmul.f32 %v414, %v362
        %v416 = vmul.f32 %v365, 1.25
        %v417 = vmul.f32 %v416, %v368
        %v418 = vadd.f32 %v415, %v417
        %v419 = vmul.f32 %v287, 1.25
        %v420 = vmul.f32 %v419, %v368
        %v421 = vmul.f32 %v371, 1.25
        %v422 = vmul.f32 %v421, %v374
        %v423 = vadd.f32 %v420, %v422
        %v424 = vmul.f32 %v288, 1.25
        %v425 = vmul.f32 %v424, %v374
        %v426 = vmul.f32 %v377, 1.25
        %v427 = vmul.f32 %v426, %v380
        %v428 = vadd.f32 %v425, %v427
        %v429 = vmul.f32 %v289, 1.25
        %v430 = vmul.f32 %v429, %v380
        %v431 = vmul.f32 %v383, 1.2500001
        %v432 = vmul.f32 %v431, %v386
        %v433 = vadd.f32 %v430, %v432
        %v434 = vmul.f32 %v290, 1.2500001
        %v435 = vmul.f32 %v434, %v386
        %v436 = vmul.f32 %v389, 1.2500001
        %v437 = vmul.f32 %v436, %v392
        %v438 = vadd.f32 %v435, %v437
        %v439 = vmul.f32 %v291, 1.2500001
        %v440 = vmul.f32 %v439, %v392
        %v441 = vmul.f32 %v395, 1.2499999
        %v442 = vmul.f32 %v441, %v398
        %v443 = vadd.f32 %v440, %v442
        %v444 = vmul.f32 %v283, 0.8333333
        %v445 = vmul.f32 %v444, %v403
        %v446 = vmul.f32 %v353, 0.8333334
        %v447 = vmul.f32 %v446, %v408
        %v448 = vadd.f32 %v445, %v447
        %v449 = vmul.f32 %v284, 0.8333334
        %v450 = vmul.f32 %v449, %v408
        %v451 = vmul.f32 %v359, 0.8333334
        %v452 = vmul.f32 %v451, %v413
        %v453 = vadd.f32 %v450, %v452
        %v454 = vmul.f32 %v285, 0.8333334
        %v455 = vmul.f32 %v454, %v413
        %v456 = vmul.f32 %v365, 0.8333333
        %v457 = vmul.f32 %v456, %v418
        %v458 = vadd.f32 %v455, %v457
        %v459 = vmul.f32 %v286, 0.8333333
        %v460 = vmul.f32 %v459, %v418
        %v461 = vmul.f32 %v371, 0.8333333
        %v462 = vmul.f32 %v461, %v423
        %v463 = vadd.f32 %v460, %v462
        %v464 = vmul.f32 %v287, 0.8333333
        %v465 = vmul.f32 %v464, %v423
        %v466 = vmul.f32 %v377, 0.8333333
        %v467 = vmul.f32 %v466, %v428
        %v468 = vadd.f32 %v465, %v467
        %v469 = vmul.f32 %v288, 0.8333333
        %v470 = vmul.f32 %v469, %v428
        %v471 = vmul.f32 %v383, 0.8333334
        %v472 = vmul.f32 %v471, %v433
        %v473 = vadd.f32 %v470, %v472
        %v474 = vmul.f32 %v289, 0.8333334
        %v475 = vmul.f32 %v474, %v433
        %v476 = vmul.f32 %v389, 0.8333334
        %v477 = vmul.f32 %v476, %v438
        %v478 = vadd.f32 %v475, %v477
        %v479 = vmul.f32 %v290, 0.8333334
        %v480 = vmul.f32 %v479, %v438
        %v481 = vmul.f32 %v395, 0.8333333
        %v482 = vmul.f32 %v481, %v443
        %v483 = vadd.f32 %v480, %v482
        %s485 = scalar_lea.vmem [#allocation1], 1
        %486 = vst [vmem:[%s485] ss:$4 sm:$0xff] %v448
        %v487 = vld.sshfl [vmem:[#allocation1] sm:$0xff pattern:$0x73625140]
        %489 = vst [vmem:[%s281] sm:$0xc] %v487
        %s491 = scalar_lea.vmem [#allocation1], 2
        %492 = vst [vmem:[%s491] ss:$4 sm:$0xff] %v453
        %v493 = vld.sshfl [vmem:[#allocation1] sm:$0xff pattern:$0x73625140]
        %495 = vst [vmem:[%s281] sm:$0x30] %v493
        %s497 = scalar_lea.vmem [#allocation1], 3
        %498 = vst [vmem:[%s497] ss:$4 sm:$0xff] %v458
        %v499 = vld.sshfl [vmem:[#allocation1] sm:$0xff pattern:$0x73625140]
        %501 = vst [vmem:[%s281] sm:$0xc0] %v499
        %502 = vst [vmem:[%s281 + $0x20] sm:$0x3] %v463
        %s504 = scalar_lea.vmem [#allocation1], 1
        %505 = vst [vmem:[%s504] ss:$4 sm:$0xff] %v468
        %v506 = vld.sshfl [vmem:[#allocation1] sm:$0xff pattern:$0x73625140]
        %508 = vst [vmem:[%s281 + $0x20] sm:$0xc] %v506
        %s510 = scalar_lea.vmem [#allocation1], 2
        %511 = vst [vmem:[%s510] ss:$4 sm:$0xff] %v473
        %v512 = vld.sshfl [vmem:[#allocation1] sm:$0xff pattern:$0x73625140]
        %514 = vst [vmem:[%s281 + $0x20] sm:$0x30] %v512
        %s516 = scalar_lea.vmem [#allocation1], 3
        %517 = vst [vmem:[%s516] ss:$4 sm:$0xff] %v478
        %v518 = vld.sshfl [vmem:[#allocation1] sm:$0xff pattern:$0x73625140]
        %520 = vst [vmem:[%s281 + $0x20] sm:$0xc0] %v518
        %521 = vst [vmem:[%s281 + $0x40] sm:$0x3] %v483
      $region33: #{a_call__.2} parent=27 // loop_footer
        %s224 = sadd.s32 1, %s220
      $region34: #{a_call__.2} parent=27 // loop_footer_branch
        %219 = sbr.rel target = $region30
      $region35: #{a_call__.2} parent=27 // loop_exit
        _
      %v522 = vld [vmem:[%s203] sm:$0xf]
      %v523 = vld [vmem:[#allocation2] sm:$0xff]
      %v524 = vld [vmem:[#allocation2 + $0x8] sm:$0xff]
      %v525 = vld [vmem:[#allocation2 + $0x10] sm:$0xff]
      %v526 = vld [vmem:[#allocation2 + $0x20] sm:$0xff]
      %v527 = vld [vmem:[#allocation2 + $0x28] sm:$0xff]
      %v528 = vld [vmem:[#allocation2 + $0x30] sm:$0xff]
      %v529 = vld [vmem:[#allocation2 + $0x40] sm:$0x3]
      %v530 = vld [vmem:[#allocation2 + $0x48] sm:$0x3]
      %v531 = vld [vmem:[#allocation2 + $0x50] sm:$0x3]
      %s532 = scalar_lea.vmem %s203, 4
      %v533 = vld [vmem:[%s532] sm:$0xf]
      %v534 = vld [vmem:[#allocation2 + $0x18] sm:$0xff]
      %v535 = vld [vmem:[#allocation2 + $0x38] sm:$0xff]
      %v536 = vld [vmem:[#allocation2 + $0x58] sm:$0x3]
      %549 = vrot.lane.b32.xlu0 %v523, 127
      %v550 = vpop.permute.xlu0 %549
      %551 = vrot.lane.b32.xlu0 %v524, 127
      %v552 = vpop.permute.xlu0 %551
      %553 = vrot.lane.b32.xlu0 %v525, 127
      %v554 = vpop.permute.xlu0 %553
      %555 = vrot.lane.b32.xlu0 %v534, 127
      %v556 = vpop.permute.xlu0 %555
      %557 = vrot.lane.b32.xlu0 %v526, 127
      %v558 = vpop.permute.xlu0 %557
      %559 = vrot.lane.b32.xlu0 %v527, 127
      %v560 = vpop.permute.xlu0 %559
      %561 = vrot.lane.b32.xlu0 %v528, 127
      %v562 = vpop.permute.xlu0 %561
      %563 = vrot.lane.b32.xlu0 %v535, 127
      %v564 = vpop.permute.xlu0 %563
      %565 = vrot.lane.b32.xlu0 %v529, 127
      %v566 = vpop.permute.xlu0 %565
      %567 = vrot.lane.b32.xlu0 %v530, 127
      %v568 = vpop.permute.xlu0 %567
      %569 = vrot.lane.b32.xlu0 %v531, 127
      %v570 = vpop.permute.xlu0 %569
      %571 = vrot.lane.b32.xlu0 %v536, 127
      %v572 = vpop.permute.xlu0 %571
      %vm573 = vcmask 1039360
      %v574 = vsel %vm573, %v550, %v552
      %v575 = vsel %vm573, %v552, %v554
      %v576 = vsel %vm573, %v554, %v556
      %v577 = vsel %vm573, %v558, %v560
      %v578 = vsel %vm573, %v560, %v562
      %v579 = vsel %vm573, %v562, %v564
      %v580 = vsel %vm573, %v566, %v568
      %v581 = vsel %vm573, %v568, %v570
      %v582 = vsel %vm573, %v570, %v572
      %vm589 = vcmask 146432
      %v591 = vsel %vm589, %v533, 0
      %vm593 = vcmask 1041408
      %v594 = vsel %vm593, %v580, 0
      %v596 = vsel %vm593, %v581, 0
      %v598 = vsel %vm593, %v582, 0
      %600 = vmatpush.msra.mxu0 0.0
      %601 = vmatpush.msra.mxu0 0.0
      %602 = vmatpush.msra.mxu0 0.0
      %603 = vmatpush.msra.mxu0 0.0
      %604 = vmatpush.msra.mxu0 0.0
      %605 = vmatpush.msra.mxu0 0.0
      %606 = vmatpush.msra.mxu0 0.0
      %607 = vmatpush.msra.mxu0 0.0
      %608 = vmatpush.msra.mxu0 0.0
      %609 = vmatpush.msra.mxu0 0.0
      %610 = vmatpush.msra.mxu0 0.0
      %611 = vmatpush.msra.mxu0 0.0
      %612 = vmatpush.msra.mxu0 0.0
      %613 = vmatpush.msra.mxu0 %v594
      %614 = vmatpush.msra.mxu0 %v577
      %615 = vmatpush.msra.mxu0 %v574
      %616 = vmatmul.f32.gmra.mxu0 %v591
      %v617 = vpop.f32.mrf.mxu0
      %v618 = vadd.f32 0.0, %v617
      %619 = vdwg.mxu0
      %620 = vmatpush.msra.mxu0 0.0
      %621 = vmatpush.msra.mxu0 0.0
      %622 = vmatpush.msra.mxu0 0.0
      %623 = vmatpush.msra.mxu0 0.0
      %624 = vmatpush.msra.mxu0 0.0
      %625 = vmatpush.msra.mxu0 0.0
      %626 = vmatpush.msra.mxu0 0.0
      %627 = vmatpush.msra.mxu0 0.0
      %628 = vmatpush.msra.mxu0 0.0
      %629 = vmatpush.msra.mxu0 0.0
      %630 = vmatpush.msra.mxu0 0.0
      %631 = vmatpush.msra.mxu0 0.0
      %632 = vmatpush.msra.mxu0 0.0
      %633 = vmatpush.msra.mxu0 %v596
      %634 = vmatpush.msra.mxu0 %v578
      %635 = vmatpush.msra.mxu0 %v575
      %636 = vmatmul.f32.gmra.mxu0 %v591
      %v637 = vpop.f32.mrf.mxu0
      %v638 = vadd.f32 0.0, %v637
      %639 = vdwg.mxu0
      %640 = vmatpush.msra.mxu0 0.0
      %641 = vmatpush.msra.mxu0 0.0
      %642 = vmatpush.msra.mxu0 0.0
      %643 = vmatpush.msra.mxu0 0.0
      %644 = vmatpush.msra.mxu0 0.0
      %645 = vmatpush.msra.mxu0 0.0
      %646 = vmatpush.msra.mxu0 0.0
      %647 = vmatpush.msra.mxu0 0.0
      %648 = vmatpush.msra.mxu0 0.0
      %649 = vmatpush.msra.mxu0 0.0
      %650 = vmatpush.msra.mxu0 0.0
      %651 = vmatpush.msra.mxu0 0.0
      %652 = vmatpush.msra.mxu0 0.0
      %653 = vmatpush.msra.mxu0 %v598
      %654 = vmatpush.msra.mxu0 %v579
      %655 = vmatpush.msra.mxu0 %v576
      %656 = vmatmul.f32.gmra.mxu0 %v591
      %v657 = vpop.f32.mrf.mxu0
      %v658 = vadd.f32 0.0, %v657
      %659 = vdwg.mxu0
      %v661 = vsel %vm589, %v522, 0
      %v663 = vsel %vm593, %v529, 0
      %v665 = vsel %vm593, %v530, 0
      %v667 = vsel %vm593, %v531, 0
      %669 = vmatpush.msra.mxu0 0.0
      %670 = vmatpush.msra.mxu0 0.0
      %671 = vmatpush.msra.mxu0 0.0
      %672 = vmatpush.msra.mxu0 0.0
      %673 = vmatpush.msra.mxu0 0.0
      %674 = vmatpush.msra.mxu0 0.0
      %675 = vmatpush.msra.mxu0 0.0
      %676 = vmatpush.msra.mxu0 0.0
      %677 = vmatpush.msra.mxu0 0.0
      %678 = vmatpush.msra.mxu0 0.0
      %679 = vmatpush.msra.mxu0 0.0
      %680 = vmatpush.msra.mxu0 0.0
      %681 = vmatpush.msra.mxu0 0.0
      %682 = vmatpush.msra.mxu0 %v663
      %683 = vmatpush.msra.mxu0 %v526
      %684 = vmatpush.msra.mxu0 %v523
      %685 = vmatmul.f32.gmra.mxu0 %v661
      %v686 = vpop.f32.mrf.mxu0
      %v687 = vadd.f32 %v618, %v686
      %688 = vdwg.mxu0
      %689 = vmatpush.msra.mxu0 0.0
      %690 = vmatpush.msra.mxu0 0.0
      %691 = vmatpush.msra.mxu0 0.0
      %692 = vmatpush.msra.mxu0 0.0
      %693 = vmatpush.msra.mxu0 0.0
      %694 = vmatpush.msra.mxu0 0.0
      %695 = vmatpush.msra.mxu0 0.0
      %696 = vmatpush.msra.mxu0 0.0
      %697 = vmatpush.msra.mxu0 0.0
      %698 = vmatpush.msra.mxu0 0.0
      %699 = vmatpush.msra.mxu0 0.0
      %700 = vmatpush.msra.mxu0 0.0
      %701 = vmatpush.msra.mxu0 0.0
      %702 = vmatpush.msra.mxu0 %v665
      %703 = vmatpush.msra.mxu0 %v527
      %704 = vmatpush.msra.mxu0 %v524
      %705 = vmatmul.f32.gmra.mxu0 %v661
      %v706 = vpop.f32.mrf.mxu0
      %v707 = vadd.f32 %v638, %v706
      %708 = vdwg.mxu0
      %709 = vmatpush.msra.mxu0 0.0
      %710 = vmatpush.msra.mxu0 0.0
      %711 = vmatpush.msra.mxu0 0.0
      %712 = vmatpush.msra.mxu0 0.0
      %713 = vmatpush.msra.mxu0 0.0
      %714 = vmatpush.msra.mxu0 0.0
      %715 = vmatpush.msra.mxu0 0.0
      %716 = vmatpush.msra.mxu0 0.0
      %717 = vmatpush.msra.mxu0 0.0
      %718 = vmatpush.msra.mxu0 0.0
      %719 = vmatpush.msra.mxu0 0.0
      %720 = vmatpush.msra.mxu0 0.0
      %721 = vmatpush.msra.mxu0 0.0
      %722 = vmatpush.msra.mxu0 %v667
      %723 = vmatpush.msra.mxu0 %v528
      %724 = vmatpush.msra.mxu0 %v525
      %725 = vmatmul.f32.gmra.mxu0 %v661
      %v726 = vpop.f32.mrf.mxu0
      %v727 = vadd.f32 %v658, %v726
      %728 = vdwg.mxu0
      %s729 = scalar_lea.vmem %s203, 8
      %v730 = vld [vmem:[%s729] sm:$0xf]
      %731 = vrot.lane.b32.xlu0 %v523, 126
      %v732 = vpop.permute.xlu0 %731
      %733 = vrot.lane.b32.xlu0 %v524, 126
      %v734 = vpop.permute.xlu0 %733
      %735 = vrot.lane.b32.xlu0 %v525, 126
      %v736 = vpop.permute.xlu0 %735
      %737 = vrot.lane.b32.xlu0 %v534, 126
      %v738 = vpop.permute.xlu0 %737
      %739 = vrot.lane.b32.xlu0 %v526, 126
      %v740 = vpop.permute.xlu0 %739
      %741 = vrot.lane.b32.xlu0 %v527, 126
      %v742 = vpop.permute.xlu0 %741
      %743 = vrot.lane.b32.xlu0 %v528, 126
      %v744 = vpop.permute.xlu0 %743
      %745 = vrot.lane.b32.xlu0 %v535, 126
      %v746 = vpop.permute.xlu0 %745
      %747 = vrot.lane.b32.xlu0 %v529, 126
      %v748 = vpop.permute.xlu0 %747
      %749 = vrot.lane.b32.xlu0 %v530, 126
      %v750 = vpop.permute.xlu0 %749
      %751 = vrot.lane.b32.xlu0 %v531, 126
      %v752 = vpop.permute.xlu0 %751
      %753 = vrot.lane.b32.xlu0 %v536, 126
      %v754 = vpop.permute.xlu0 %753
      %vm755 = vcmask 1031168
      %v756 = vsel %vm755, %v732, %v734
      %v757 = vsel %vm755, %v734, %v736
      %v758 = vsel %vm755, %v736, %v738
      %v759 = vsel %vm755, %v740, %v742
      %v760 = vsel %vm755, %v742, %v744
      %v761 = vsel %vm755, %v744, %v746
      %v762 = vsel %vm755, %v748, %v750
      %v763 = vsel %vm755, %v750, %v752
      %v764 = vsel %vm755, %v752, %v754
      %v772 = vsel %vm589, %v730, 0
      %v774 = vsel %vm593, %v762, 0
      %v776 = vsel %vm593, %v763, 0
      %v778 = vsel %vm593, %v764, 0
      %780 = vmatpush.msra.mxu0 0.0
      %781 = vmatpush.msra.mxu0 0.0
      %782 = vmatpush.msra.mxu0 0.0
      %783 = vmatpush.msra.mxu0 0.0
      %784 = vmatpush.msra.mxu0 0.0
      %785 = vmatpush.msra.mxu0 0.0
      %786 = vmatpush.msra.mxu0 0.0
      %787 = vmatpush.msra.mxu0 0.0
      %788 = vmatpush.msra.mxu0 0.0
      %789 = vmatpush.msra.mxu0 0.0
      %790 = vmatpush.msra.mxu0 0.0
      %791 = vmatpush.msra.mxu0 0.0
      %792 = vmatpush.msra.mxu0 0.0
      %793 = vmatpush.msra.mxu0 %v774
      %794 = vmatpush.msra.mxu0 %v759
      %795 = vmatpush.msra.mxu0 %v756
      %796 = vmatmul.f32.gmra.mxu0 %v772
      %v797 = vpop.f32.mrf.mxu0
      %v798 = vadd.f32 0.0, %v797
      %799 = vdwg.mxu0
      %800 = vmatpush.msra.mxu0 0.0
      %801 = vmatpush.msra.mxu0 0.0
      %802 = vmatpush.msra.mxu0 0.0
      %803 = vmatpush.msra.mxu0 0.0
      %804 = vmatpush.msra.mxu0 0.0
      %805 = vmatpush.msra.mxu0 0.0
      %806 = vmatpush.msra.mxu0 0.0
      %807 = vmatpush.msra.mxu0 0.0
      %808 = vmatpush.msra.mxu0 0.0
      %809 = vmatpush.msra.mxu0 0.0
      %810 = vmatpush.msra.mxu0 0.0
      %811 = vmatpush.msra.mxu0 0.0
      %812 = vmatpush.msra.mxu0 0.0
      %813 = vmatpush.msra.mxu0 %v776
      %814 = vmatpush.msra.mxu0 %v760
      %815 = vmatpush.msra.mxu0 %v757
      %816 = vmatmul.f32.gmra.mxu0 %v772
      %v817 = vpop.f32.mrf.mxu0
      %v818 = vadd.f32 0.0, %v817
      %819 = vdwg.mxu0
      %820 = vmatpush.msra.mxu0 0.0
      %821 = vmatpush.msra.mxu0 0.0
      %822 = vmatpush.msra.mxu0 0.0
      %823 = vmatpush.msra.mxu0 0.0
      %824 = vmatpush.msra.mxu0 0.0
      %825 = vmatpush.msra.mxu0 0.0
      %826 = vmatpush.msra.mxu0 0.0
      %827 = vmatpush.msra.mxu0 0.0
      %828 = vmatpush.msra.mxu0 0.0
      %829 = vmatpush.msra.mxu0 0.0
      %830 = vmatpush.msra.mxu0 0.0
      %831 = vmatpush.msra.mxu0 0.0
      %832 = vmatpush.msra.mxu0 0.0
      %833 = vmatpush.msra.mxu0 %v778
      %834 = vmatpush.msra.mxu0 %v761
      %835 = vmatpush.msra.mxu0 %v758
      %836 = vmatmul.f32.gmra.mxu0 %v772
      %v837 = vpop.f32.mrf.mxu0
      %v838 = vadd.f32 0.0, %v837
      %839 = vdwg.mxu0
      %v840 = vadd.f32 %v687, %v798
      %v841 = vadd.f32 %v707, %v818
      %v842 = vadd.f32 %v727, %v838
      %s843 = scalar_lea.vmem %s203, 12
      %v844 = vld [vmem:[%s843] sm:$0xf]
      %845 = vrot.lane.b32.xlu0 %v523, 110
      %v846 = vpop.permute.xlu0 %845
      %847 = vrot.lane.b32.xlu0 %v524, 110
      %v848 = vpop.permute.xlu0 %847
      %849 = vrot.lane.b32.xlu0 %v525, 110
      %v850 = vpop.permute.xlu0 %849
      %851 = vrot.lane.b32.xlu0 %v534, 110
      %v852 = vpop.permute.xlu0 %851
      %853 = vrot.lane.b32.xlu0 %v526, 110
      %v854 = vpop.permute.xlu0 %853
      %855 = vrot.lane.b32.xlu0 %v527, 110
      %v856 = vpop.permute.xlu0 %855
      %857 = vrot.lane.b32.xlu0 %v528, 110
      %v858 = vpop.permute.xlu0 %857
      %859 = vrot.lane.b32.xlu0 %v535, 110
      %v860 = vpop.permute.xlu0 %859
      %861 = vrot.lane.b32.xlu0 %v529, 110
      %v862 = vpop.permute.xlu0 %861
      %863 = vrot.lane.b32.xlu0 %v530, 110
      %v864 = vpop.permute.xlu0 %863
      %865 = vrot.lane.b32.xlu0 %v531, 110
      %v866 = vpop.permute.xlu0 %865
      %867 = vrot.lane.b32.xlu0 %v536, 110
      %v868 = vpop.permute.xlu0 %867
      %vm869 = vcmask 900096
      %v870 = vsel %vm869, %v846, %v848
      %v871 = vsel %vm869, %v848, %v850
      %v872 = vsel %vm869, %v850, %v852
      %v873 = vsel %vm869, %v854, %v856
      %v874 = vsel %vm869, %v856, %v858
      %v875 = vsel %vm869, %v858, %v860
      %v876 = vsel %vm869, %v862, %v864
      %v877 = vsel %vm869, %v864, %v866
      %v878 = vsel %vm869, %v866, %v868
      %v886 = vsel %vm589, %v844, 0
      %v888 = vsel %vm593, %v876, 0
      %v890 = vsel %vm593, %v877, 0
      %v892 = vsel %vm593, %v878, 0
      %894 = vmatpush.msra.mxu0 0.0
      %895 = vmatpush.msra.mxu0 0.0
      %896 = vmatpush.msra.mxu0 0.0
      %897 = vmatpush.msra.mxu0 0.0
      %898 = vmatpush.msra.mxu0 0.0
      %899 = vmatpush.msra.mxu0 0.0
      %900 = vmatpush.msra.mxu0 0.0
      %901 = vmatpush.msra.mxu0 0.0
      %902 = vmatpush.msra.mxu0 0.0
      %903 = vmatpush.msra.mxu0 0.0
      %904 = vmatpush.msra.mxu0 0.0
      %905 = vmatpush.msra.mxu0 0.0
      %906 = vmatpush.msra.mxu0 0.0
      %907 = vmatpush.msra.mxu0 %v888
      %908 = vmatpush.msra.mxu0 %v873
      %909 = vmatpush.msra.mxu0 %v870
      %910 = vmatmul.f32.gmra.mxu0 %v886
      %v911 = vpop.f32.mrf.mxu0
      %v912 = vadd.f32 0.0, %v911
      %913 = vdwg.mxu0
      %914 = vmatpush.msra.mxu0 0.0
      %915 = vmatpush.msra.mxu0 0.0
      %916 = vmatpush.msra.mxu0 0.0
      %917 = vmatpush.msra.mxu0 0.0
      %918 = vmatpush.msra.mxu0 0.0
      %919 = vmatpush.msra.mxu0 0.0
      %920 = vmatpush.msra.mxu0 0.0
      %921 = vmatpush.msra.mxu0 0.0
      %922 = vmatpush.msra.mxu0 0.0
      %923 = vmatpush.msra.mxu0 0.0
      %924 = vmatpush.msra.mxu0 0.0
      %925 = vmatpush.msra.mxu0 0.0
      %926 = vmatpush.msra.mxu0 0.0
      %927 = vmatpush.msra.mxu0 %v890
      %928 = vmatpush.msra.mxu0 %v874
      %929 = vmatpush.msra.mxu0 %v871
      %930 = vmatmul.f32.gmra.mxu0 %v886
      %v931 = vpop.f32.mrf.mxu0
      %v932 = vadd.f32 0.0, %v931
      %933 = vdwg.mxu0
      %934 = vmatpush.msra.mxu0 0.0
      %935 = vmatpush.msra.mxu0 0.0
      %936 = vmatpush.msra.mxu0 0.0
      %937 = vmatpush.msra.mxu0 0.0
      %938 = vmatpush.msra.mxu0 0.0
      %939 = vmatpush.msra.mxu0 0.0
      %940 = vmatpush.msra.mxu0 0.0
      %941 = vmatpush.msra.mxu0 0.0
      %942 = vmatpush.msra.mxu0 0.0
      %943 = vmatpush.msra.mxu0 0.0
      %944 = vmatpush.msra.mxu0 0.0
      %945 = vmatpush.msra.mxu0 0.0
      %946 = vmatpush.msra.mxu0 0.0
      %947 = vmatpush.msra.mxu0 %v892
      %948 = vmatpush.msra.mxu0 %v875
      %949 = vmatpush.msra.mxu0 %v872
      %950 = vmatmul.f32.gmra.mxu0 %v886
      %v951 = vpop.f32.mrf.mxu0
      %v952 = vadd.f32 0.0, %v951
      %953 = vdwg.mxu0
      %v954 = vadd.f32 %v840, %v912
      %v955 = vadd.f32 %v841, %v932
      %v956 = vadd.f32 %v842, %v952
      %s957 = scalar_lea.vmem %s203, 16
      %v958 = vld [vmem:[%s957] sm:$0xf]
      %959 = vrot.lane.b32.xlu0 %v523, 109
      %v960 = vpop.permute.xlu0 %959
      %961 = vrot.lane.b32.xlu0 %v524, 109
      %v962 = vpop.permute.xlu0 %961
      %963 = vrot.lane.b32.xlu0 %v525, 109
      %v964 = vpop.permute.xlu0 %963
      %965 = vrot.lane.b32.xlu0 %v534, 109
      %v966 = vpop.permute.xlu0 %965
      %967 = vrot.lane.b32.xlu0 %v526, 109
      %v968 = vpop.permute.xlu0 %967
      %969 = vrot.lane.b32.xlu0 %v527, 109
      %v970 = vpop.permute.xlu0 %969
      %971 = vrot.lane.b32.xlu0 %v528, 109
      %v972 = vpop.permute.xlu0 %971
      %973 = vrot.lane.b32.xlu0 %v535, 109
      %v974 = vpop.permute.xlu0 %973
      %975 = vrot.lane.b32.xlu0 %v529, 109
      %v976 = vpop.permute.xlu0 %975
      %977 = vrot.lane.b32.xlu0 %v530, 109
      %v978 = vpop.permute.xlu0 %977
      %979 = vrot.lane.b32.xlu0 %v531, 109
      %v980 = vpop.permute.xlu0 %979
      %981 = vrot.lane.b32.xlu0 %v536, 109
      %v982 = vpop.permute.xlu0 %981
      %vm983 = vcmask 891904
      %v984 = vsel %vm983, %v960, %v962
      %v985 = vsel %vm983, %v962, %v964
      %v986 = vsel %vm983, %v964, %v966
      %v987 = vsel %vm983, %v968, %v970
      %v988 = vsel %vm983, %v970, %v972
      %v989 = vsel %vm983, %v972, %v974
      %v990 = vsel %vm983, %v976, %v978
      %v991 = vsel %vm983, %v978, %v980
      %v992 = vsel %vm983, %v980, %v982
      %v1000 = vsel %vm589, %v958, 0
      %v1002 = vsel %vm593, %v990, 0
      %v1004 = vsel %vm593, %v991, 0
      %v1006 = vsel %vm593, %v992, 0
      %1008 = vmatpush.msra.mxu0 0.0
      %1009 = vmatpush.msra.mxu0 0.0
      %1010 = vmatpush.msra.mxu0 0.0
      %1011 = vmatpush.msra.mxu0 0.0
      %1012 = vmatpush.msra.mxu0 0.0
      %1013 = vmatpush.msra.mxu0 0.0
      %1014 = vmatpush.msra.mxu0 0.0
      %1015 = vmatpush.msra.mxu0 0.0
      %1016 = vmatpush.msra.mxu0 0.0
      %1017 = vmatpush.msra.mxu0 0.0
      %1018 = vmatpush.msra.mxu0 0.0
      %1019 = vmatpush.msra.mxu0 0.0
      %1020 = vmatpush.msra.mxu0 0.0
      %1021 = vmatpush.msra.mxu0 %v1002
      %1022 = vmatpush.msra.mxu0 %v987
      %1023 = vmatpush.msra.mxu0 %v984
      %1024 = vmatmul.f32.gmra.mxu0 %v1000
      %v1025 = vpop.f32.mrf.mxu0
      %v1026 = vadd.f32 0.0, %v1025
      %1027 = vdwg.mxu0
      %1028 = vmatpush.msra.mxu0 0.0
      %1029 = vmatpush.msra.mxu0 0.0
      %1030 = vmatpush.msra.mxu0 0.0
      %1031 = vmatpush.msra.mxu0 0.0
      %1032 = vmatpush.msra.mxu0 0.0
      %1033 = vmatpush.msra.mxu0 0.0
      %1034 = vmatpush.msra.mxu0 0.0
      %1035 = vmatpush.msra.mxu0 0.0
      %1036 = vmatpush.msra.mxu0 0.0
      %1037 = vmatpush.msra.mxu0 0.0
      %1038 = vmatpush.msra.mxu0 0.0
      %1039 = vmatpush.msra.mxu0 0.0
      %1040 = vmatpush.msra.mxu0 0.0
      %1041 = vmatpush.msra.mxu0 %v1004
      %1042 = vmatpush.msra.mxu0 %v988
      %1043 = vmatpush.msra.mxu0 %v985
      %1044 = vmatmul.f32.gmra.mxu0 %v1000
      %v1045 = vpop.f32.mrf.mxu0
      %v1046 = vadd.f32 0.0, %v1045
      %1047 = vdwg.mxu0
      %1048 = vmatpush.msra.mxu0 0.0
      %1049 = vmatpush.msra.mxu0 0.0
      %1050 = vmatpush.msra.mxu0 0.0
      %1051 = vmatpush.msra.mxu0 0.0
      %1052 = vmatpush.msra.mxu0 0.0
      %1053 = vmatpush.msra.mxu0 0.0
      %1054 = vmatpush.msra.mxu0 0.0
      %1055 = vmatpush.msra.mxu0 0.0
      %1056 = vmatpush.msra.mxu0 0.0
      %1057 = vmatpush.msra.mxu0 0.0
      %1058 = vmatpush.msra.mxu0 0.0
      %1059 = vmatpush.msra.mxu0 0.0
      %1060 = vmatpush.msra.mxu0 0.0
      %1061 = vmatpush.msra.mxu0 %v1006
      %1062 = vmatpush.msra.mxu0 %v989
      %1063 = vmatpush.msra.mxu0 %v986
      %1064 = vmatmul.f32.gmra.mxu0 %v1000
      %v1065 = vpop.f32.mrf.mxu0
      %v1066 = vadd.f32 0.0, %v1065
      %1067 = vdwg.mxu0
      %v1068 = vadd.f32 %v954, %v1026
      %v1069 = vadd.f32 %v955, %v1046
      %v1070 = vadd.f32 %v956, %v1066
      %s1071 = scalar_lea.vmem %s203, 20
      %v1072 = vld [vmem:[%s1071] sm:$0xf]
      %1073 = vrot.lane.b32.xlu0 %v523, 108
      %v1074 = vpop.permute.xlu0 %1073
      %1075 = vrot.lane.b32.xlu0 %v524, 108
      %v1076 = vpop.permute.xlu0 %1075
      %1077 = vrot.lane.b32.xlu0 %v525, 108
      %v1078 = vpop.permute.xlu0 %1077
      %1079 = vrot.lane.b32.xlu0 %v534, 108
      %v1080 = vpop.permute.xlu0 %1079
      %1081 = vrot.lane.b32.xlu0 %v526, 108
      %v1082 = vpop.permute.xlu0 %1081
      %1083 = vrot.lane.b32.xlu0 %v527, 108
      %v1084 = vpop.permute.xlu0 %1083
      %1085 = vrot.lane.b32.xlu0 %v528, 108
      %v1086 = vpop.permute.xlu0 %1085
      %1087 = vrot.lane.b32.xlu0 %v535, 108
      %v1088 = vpop.permute.xlu0 %1087
      %1089 = vrot.lane.b32.xlu0 %v529, 108
      %v1090 = vpop.permute.xlu0 %1089
      %1091 = vrot.lane.b32.xlu0 %v530, 108
      %v1092 = vpop.permute.xlu0 %1091
      %1093 = vrot.lane.b32.xlu0 %v531, 108
      %v1094 = vpop.permute.xlu0 %1093
      %1095 = vrot.lane.b32.xlu0 %v536, 108
      %v1096 = vpop.permute.xlu0 %1095
      %vm1097 = vcmask 883712
      %v1098 = vsel %vm1097, %v1074, %v1076
      %v1099 = vsel %vm1097, %v1076, %v1078
      %v1100 = vsel %vm1097, %v1078, %v1080
      %v1101 = vsel %vm1097, %v1082, %v1084
      %v1102 = vsel %vm1097, %v1084, %v1086
      %v1103 = vsel %vm1097, %v1086, %v1088
      %v1104 = vsel %vm1097, %v1090, %v1092
      %v1105 = vsel %vm1097, %v1092, %v1094
      %v1106 = vsel %vm1097, %v1094, %v1096
      %v1114 = vsel %vm589, %v1072, 0
      %v1116 = vsel %vm593, %v1104, 0
      %v1118 = vsel %vm593, %v1105, 0
      %v1120 = vsel %vm593, %v1106, 0
      %1122 = vmatpush.msra.mxu0 0.0
      %1123 = vmatpush.msra.mxu0 0.0
      %1124 = vmatpush.msra.mxu0 0.0
      %1125 = vmatpush.msra.mxu0 0.0
      %1126 = vmatpush.msra.mxu0 0.0
      %1127 = vmatpush.msra.mxu0 0.0
      %1128 = vmatpush.msra.mxu0 0.0
      %1129 = vmatpush.msra.mxu0 0.0
      %1130 = vmatpush.msra.mxu0 0.0
      %1131 = vmatpush.msra.mxu0 0.0
      %1132 = vmatpush.msra.mxu0 0.0
      %1133 = vmatpush.msra.mxu0 0.0
      %1134 = vmatpush.msra.mxu0 0.0
      %1135 = vmatpush.msra.mxu0 %v1116
      %1136 = vmatpush.msra.mxu0 %v1101
      %1137 = vmatpush.msra.mxu0 %v1098
      %1138 = vmatmul.f32.gmra.mxu0 %v1114
      %v1139 = vpop.f32.mrf.mxu0
      %v1140 = vadd.f32 0.0, %v1139
      %1141 = vdwg.mxu0
      %1142 = vmatpush.msra.mxu0 0.0
      %1143 = vmatpush.msra.mxu0 0.0
      %1144 = vmatpush.msra.mxu0 0.0
      %1145 = vmatpush.msra.mxu0 0.0
      %1146 = vmatpush.msra.mxu0 0.0
      %1147 = vmatpush.msra.mxu0 0.0
      %1148 = vmatpush.msra.mxu0 0.0
      %1149 = vmatpush.msra.mxu0 0.0
      %1150 = vmatpush.msra.mxu0 0.0
      %1151 = vmatpush.msra.mxu0 0.0
      %1152 = vmatpush.msra.mxu0 0.0
      %1153 = vmatpush.msra.mxu0 0.0
      %1154 = vmatpush.msra.mxu0 0.0
      %1155 = vmatpush.msra.mxu0 %v1118
      %1156 = vmatpush.msra.mxu0 %v1102
      %1157 = vmatpush.msra.mxu0 %v1099
      %1158 = vmatmul.f32.gmra.mxu0 %v1114
      %v1159 = vpop.f32.mrf.mxu0
      %v1160 = vadd.f32 0.0, %v1159
      %1161 = vdwg.mxu0
      %1162 = vmatpush.msra.mxu0 0.0
      %1163 = vmatpush.msra.mxu0 0.0
      %1164 = vmatpush.msra.mxu0 0.0
      %1165 = vmatpush.msra.mxu0 0.0
      %1166 = vmatpush.msra.mxu0 0.0
      %1167 = vmatpush.msra.mxu0 0.0
      %1168 = vmatpush.msra.mxu0 0.0
      %1169 = vmatpush.msra.mxu0 0.0
      %1170 = vmatpush.msra.mxu0 0.0
      %1171 = vmatpush.msra.mxu0 0.0
      %1172 = vmatpush.msra.mxu0 0.0
      %1173 = vmatpush.msra.mxu0 0.0
      %1174 = vmatpush.msra.mxu0 0.0
      %1175 = vmatpush.msra.mxu0 %v1120
      %1176 = vmatpush.msra.mxu0 %v1103
      %1177 = vmatpush.msra.mxu0 %v1100
      %1178 = vmatmul.f32.gmra.mxu0 %v1114
      %v1179 = vpop.f32.mrf.mxu0
      %v1180 = vadd.f32 0.0, %v1179
      %1181 = vdwg.mxu0
      %v1182 = vadd.f32 %v1068, %v1140
      %v1183 = vadd.f32 %v1069, %v1160
      %v1184 = vadd.f32 %v1070, %v1180
      %s1185 = scalar_lea.vmem %s203, 24
      %v1186 = vld [vmem:[%s1185] sm:$0xf]
      %1187 = vrot.lane.b32.xlu0 %v523, 92
      %v1188 = vpop.permute.xlu0 %1187
      %1189 = vrot.lane.b32.xlu0 %v524, 92
      %v1190 = vpop.permute.xlu0 %1189
      %1191 = vrot.lane.b32.xlu0 %v525, 92
      %v1192 = vpop.permute.xlu0 %1191
      %1193 = vrot.lane.b32.xlu0 %v534, 92
      %v1194 = vpop.permute.xlu0 %1193
      %1195 = vrot.lane.b32.xlu0 %v526, 92
      %v1196 = vpop.permute.xlu0 %1195
      %1197 = vrot.lane.b32.xlu0 %v527, 92
      %v1198 = vpop.permute.xlu0 %1197
      %1199 = vrot.lane.b32.xlu0 %v528, 92
      %v1200 = vpop.permute.xlu0 %1199
      %1201 = vrot.lane.b32.xlu0 %v535, 92
      %v1202 = vpop.permute.xlu0 %1201
      %1203 = vrot.lane.b32.xlu0 %v529, 92
      %v1204 = vpop.permute.xlu0 %1203
      %1205 = vrot.lane.b32.xlu0 %v530, 92
      %v1206 = vpop.permute.xlu0 %1205
      %1207 = vrot.lane.b32.xlu0 %v531, 92
      %v1208 = vpop.permute.xlu0 %1207
      %1209 = vrot.lane.b32.xlu0 %v536, 92
      %v1210 = vpop.permute.xlu0 %1209
      %vm1211 = vcmask 752640
      %v1212 = vsel %vm1211, %v1188, %v1190
      %v1213 = vsel %vm1211, %v1190, %v1192
      %v1214 = vsel %vm1211, %v1192, %v1194
      %v1215 = vsel %vm1211, %v1196, %v1198
      %v1216 = vsel %vm1211, %v1198, %v1200
      %v1217 = vsel %vm1211, %v1200, %v1202
      %v1218 = vsel %vm1211, %v1204, %v1206
      %v1219 = vsel %vm1211, %v1206, %v1208
      %v1220 = vsel %vm1211, %v1208, %v1210
      %v1228 = vsel %vm589, %v1186, 0
      %v1230 = vsel %vm593, %v1218, 0
      %v1232 = vsel %vm593, %v1219, 0
      %v1234 = vsel %vm593, %v1220, 0
      %1236 = vmatpush.msra.mxu0 0.0
      %1237 = vmatpush.msra.mxu0 0.0
      %1238 = vmatpush.msra.mxu0 0.0
      %1239 = vmatpush.msra.mxu0 0.0
      %1240 = vmatpush.msra.mxu0 0.0
      %1241 = vmatpush.msra.mxu0 0.0
      %1242 = vmatpush.msra.mxu0 0.0
      %1243 = vmatpush.msra.mxu0 0.0
      %1244 = vmatpush.msra.mxu0 0.0
      %1245 = vmatpush.msra.mxu0 0.0
      %1246 = vmatpush.msra.mxu0 0.0
      %1247 = vmatpush.msra.mxu0 0.0
      %1248 = vmatpush.msra.mxu0 0.0
      %1249 = vmatpush.msra.mxu0 %v1230
      %1250 = vmatpush.msra.mxu0 %v1215
      %1251 = vmatpush.msra.mxu0 %v1212
      %1252 = vmatmul.f32.gmra.mxu0 %v1228
      %v1253 = vpop.f32.mrf.mxu0
      %v1254 = vadd.f32 0.0, %v1253
      %1255 = vdwg.mxu0
      %1256 = vmatpush.msra.mxu0 0.0
      %1257 = vmatpush.msra.mxu0 0.0
      %1258 = vmatpush.msra.mxu0 0.0
      %1259 = vmatpush.msra.mxu0 0.0
      %1260 = vmatpush.msra.mxu0 0.0
      %1261 = vmatpush.msra.mxu0 0.0
      %1262 = vmatpush.msra.mxu0 0.0
      %1263 = vmatpush.msra.mxu0 0.0
      %1264 = vmatpush.msra.mxu0 0.0
      %1265 = vmatpush.msra.mxu0 0.0
      %1266 = vmatpush.msra.mxu0 0.0
      %1267 = vmatpush.msra.mxu0 0.0
      %1268 = vmatpush.msra.mxu0 0.0
      %1269 = vmatpush.msra.mxu0 %v1232
      %1270 = vmatpush.msra.mxu0 %v1216
      %1271 = vmatpush.msra.mxu0 %v1213
      %1272 = vmatmul.f32.gmra.mxu0 %v1228
      %v1273 = vpop.f32.mrf.mxu0
      %v1274 = vadd.f32 0.0, %v1273
      %1275 = vdwg.mxu0
      %1276 = vmatpush.msra.mxu0 0.0
      %1277 = vmatpush.msra.mxu0 0.0
      %1278 = vmatpush.msra.mxu0 0.0
      %1279 = vmatpush.msra.mxu0 0.0
      %1280 = vmatpush.msra.mxu0 0.0
      %1281 = vmatpush.msra.mxu0 0.0
      %1282 = vmatpush.msra.mxu0 0.0
      %1283 = vmatpush.msra.mxu0 0.0
      %1284 = vmatpush.msra.mxu0 0.0
      %1285 = vmatpush.msra.mxu0 0.0
      %1286 = vmatpush.msra.mxu0 0.0
      %1287 = vmatpush.msra.mxu0 0.0
      %1288 = vmatpush.msra.mxu0 0.0
      %1289 = vmatpush.msra.mxu0 %v1234
      %1290 = vmatpush.msra.mxu0 %v1217
      %1291 = vmatpush.msra.mxu0 %v1214
      %1292 = vmatmul.f32.gmra.mxu0 %v1228
      %v1293 = vpop.f32.mrf.mxu0
      %v1294 = vadd.f32 0.0, %v1293
      %1295 = vdwg.mxu0
      %v1296 = vadd.f32 %v1182, %v1254
      %v1297 = vadd.f32 %v1183, %v1274
      %v1298 = vadd.f32 %v1184, %v1294
      %s1299 = scalar_lea.vmem %s203, 28
      %v1300 = vld [vmem:[%s1299] sm:$0xf]
      %1301 = vrot.lane.b32.xlu0 %v523, 91
      %v1302 = vpop.permute.xlu0 %1301
      %1303 = vrot.lane.b32.xlu0 %v524, 91
      %v1304 = vpop.permute.xlu0 %1303
      %1305 = vrot.lane.b32.xlu0 %v525, 91
      %v1306 = vpop.permute.xlu0 %1305
      %1307 = vrot.lane.b32.xlu0 %v534, 91
      %v1308 = vpop.permute.xlu0 %1307
      %1309 = vrot.lane.b32.xlu0 %v526, 91
      %v1310 = vpop.permute.xlu0 %1309
      %1311 = vrot.lane.b32.xlu0 %v527, 91
      %v1312 = vpop.permute.xlu0 %1311
      %1313 = vrot.lane.b32.xlu0 %v528, 91
      %v1314 = vpop.permute.xlu0 %1313
      %1315 = vrot.lane.b32.xlu0 %v535, 91
      %v1316 = vpop.permute.xlu0 %1315
      %1317 = vrot.lane.b32.xlu0 %v529, 91
      %v1318 = vpop.permute.xlu0 %1317
      %1319 = vrot.lane.b32.xlu0 %v530, 91
      %v1320 = vpop.permute.xlu0 %1319
      %1321 = vrot.lane.b32.xlu0 %v531, 91
      %v1322 = vpop.permute.xlu0 %1321
      %1323 = vrot.lane.b32.xlu0 %v536, 91
      %v1324 = vpop.permute.xlu0 %1323
      %vm1325 = vcmask 744448
      %v1326 = vsel %vm1325, %v1302, %v1304
      %v1327 = vsel %vm1325, %v1304, %v1306
      %v1328 = vsel %vm1325, %v1306, %v1308
      %v1329 = vsel %vm1325, %v1310, %v1312
      %v1330 = vsel %vm1325, %v1312, %v1314
      %v1331 = vsel %vm1325, %v1314, %v1316
      %v1332 = vsel %vm1325, %v1318, %v1320
      %v1333 = vsel %vm1325, %v1320, %v1322
      %v1334 = vsel %vm1325, %v1322, %v1324
      %v1342 = vsel %vm589, %v1300, 0
      %v1344 = vsel %vm593, %v1332, 0
      %v1346 = vsel %vm593, %v1333, 0
      %v1348 = vsel %vm593, %v1334, 0
      %1350 = vmatpush.msra.mxu0 0.0
      %1351 = vmatpush.msra.mxu0 0.0
      %1352 = vmatpush.msra.mxu0 0.0
      %1353 = vmatpush.msra.mxu0 0.0
      %1354 = vmatpush.msra.mxu0 0.0
      %1355 = vmatpush.msra.mxu0 0.0
      %1356 = vmatpush.msra.mxu0 0.0
      %1357 = vmatpush.msra.mxu0 0.0
      %1358 = vmatpush.msra.mxu0 0.0
      %1359 = vmatpush.msra.mxu0 0.0
      %1360 = vmatpush.msra.mxu0 0.0
      %1361 = vmatpush.msra.mxu0 0.0
      %1362 = vmatpush.msra.mxu0 0.0
      %1363 = vmatpush.msra.mxu0 %v1344
      %1364 = vmatpush.msra.mxu0 %v1329
      %1365 = vmatpush.msra.mxu0 %v1326
      %1366 = vmatmul.f32.gmra.mxu0 %v1342
      %v1367 = vpop.f32.mrf.mxu0
      %v1368 = vadd.f32 0.0, %v1367
      %1369 = vdwg.mxu0
      %1370 = vmatpush.msra.mxu0 0.0
      %1371 = vmatpush.msra.mxu0 0.0
      %1372 = vmatpush.msra.mxu0 0.0
      %1373 = vmatpush.msra.mxu0 0.0
      %1374 = vmatpush.msra.mxu0 0.0
      %1375 = vmatpush.msra.mxu0 0.0
      %1376 = vmatpush.msra.mxu0 0.0
      %1377 = vmatpush.msra.mxu0 0.0
      %1378 = vmatpush.msra.mxu0 0.0
      %1379 = vmatpush.msra.mxu0 0.0
      %1380 = vmatpush.msra.mxu0 0.0
      %1381 = vmatpush.msra.mxu0 0.0
      %1382 = vmatpush.msra.mxu0 0.0
      %1383 = vmatpush.msra.mxu0 %v1346
      %1384 = vmatpush.msra.mxu0 %v1330
      %1385 = vmatpush.msra.mxu0 %v1327
      %1386 = vmatmul.f32.gmra.mxu0 %v1342
      %v1387 = vpop.f32.mrf.mxu0
      %v1388 = vadd.f32 0.0, %v1387
      %1389 = vdwg.mxu0
      %1390 = vmatpush.msra.mxu0 0.0
      %1391 = vmatpush.msra.mxu0 0.0
      %1392 = vmatpush.msra.mxu0 0.0
      %1393 = vmatpush.msra.mxu0 0.0
      %1394 = vmatpush.msra.mxu0 0.0
      %1395 = vmatpush.msra.mxu0 0.0
      %1396 = vmatpush.msra.mxu0 0.0
      %1397 = vmatpush.msra.mxu0 0.0
      %1398 = vmatpush.msra.mxu0 0.0
      %1399 = vmatpush.msra.mxu0 0.0
      %1400 = vmatpush.msra.mxu0 0.0
      %1401 = vmatpush.msra.mxu0 0.0
      %1402 = vmatpush.msra.mxu0 0.0
      %1403 = vmatpush.msra.mxu0 %v1348
      %1404 = vmatpush.msra.mxu0 %v1331
      %1405 = vmatpush.msra.mxu0 %v1328
      %1406 = vmatmul.f32.gmra.mxu0 %v1342
      %v1407 = vpop.f32.mrf.mxu0
      %v1408 = vadd.f32 0.0, %v1407
      %1409 = vdwg.mxu0
      %v1410 = vadd.f32 %v1296, %v1368
      %v1411 = vadd.f32 %v1297, %v1388
      %v1412 = vadd.f32 %v1298, %v1408
      %s1413 = scalar_lea.vmem %s203, 32
      %v1414 = vld [vmem:[%s1413] sm:$0xf]
      %1415 = vrot.lane.b32.xlu0 %v523, 90
      %v1416 = vpop.permute.xlu0 %1415
      %1417 = vrot.lane.b32.xlu0 %v524, 90
      %v1418 = vpop.permute.xlu0 %1417
      %1419 = vrot.lane.b32.xlu0 %v525, 90
      %v1420 = vpop.permute.xlu0 %1419
      %1421 = vrot.lane.b32.xlu0 %v534, 90
      %v1422 = vpop.permute.xlu0 %1421
      %1423 = vrot.lane.b32.xlu0 %v526, 90
      %v1424 = vpop.permute.xlu0 %1423
      %1425 = vrot.lane.b32.xlu0 %v527, 90
      %v1426 = vpop.permute.xlu0 %1425
      %1427 = vrot.lane.b32.xlu0 %v528, 90
      %v1428 = vpop.permute.xlu0 %1427
      %1429 = vrot.lane.b32.xlu0 %v535, 90
      %v1430 = vpop.permute.xlu0 %1429
      %1431 = vrot.lane.b32.xlu0 %v529, 90
      %v1432 = vpop.permute.xlu0 %1431
      %1433 = vrot.lane.b32.xlu0 %v530, 90
      %v1434 = vpop.permute.xlu0 %1433
      %1435 = vrot.lane.b32.xlu0 %v531, 90
      %v1436 = vpop.permute.xlu0 %1435
      %1437 = vrot.lane.b32.xlu0 %v536, 90
      %v1438 = vpop.permute.xlu0 %1437
      %vm1439 = vcmask 736256
      %v1440 = vsel %vm1439, %v1416, %v1418
      %v1441 = vsel %vm1439, %v1418, %v1420
      %v1442 = vsel %vm1439, %v1420, %v1422
      %v1443 = vsel %vm1439, %v1424, %v1426
      %v1444 = vsel %vm1439, %v1426, %v1428
      %v1445 = vsel %vm1439, %v1428, %v1430
      %v1446 = vsel %vm1439, %v1432, %v1434
      %v1447 = vsel %vm1439, %v1434, %v1436
      %v1448 = vsel %vm1439, %v1436, %v1438
      %v1456 = vsel %vm589, %v1414, 0
      %v1458 = vsel %vm593, %v1446, 0
      %v1460 = vsel %vm593, %v1447, 0
      %v1462 = vsel %vm593, %v1448, 0
      %1464 = vmatpush.msra.mxu0 0.0
      %1465 = vmatpush.msra.mxu0 0.0
      %1466 = vmatpush.msra.mxu0 0.0
      %1467 = vmatpush.msra.mxu0 0.0
      %1468 = vmatpush.msra.mxu0 0.0
      %1469 = vmatpush.msra.mxu0 0.0
      %1470 = vmatpush.msra.mxu0 0.0
      %1471 = vmatpush.msra.mxu0 0.0
      %1472 = vmatpush.msra.mxu0 0.0
      %1473 = vmatpush.msra.mxu0 0.0
      %1474 = vmatpush.msra.mxu0 0.0
      %1475 = vmatpush.msra.mxu0 0.0
      %1476 = vmatpush.msra.mxu0 0.0
      %1477 = vmatpush.msra.mxu0 %v1458
      %1478 = vmatpush.msra.mxu0 %v1443
      %1479 = vmatpush.msra.mxu0 %v1440
      %1480 = vmatmul.f32.gmra.mxu0 %v1456
      %v1481 = vpop.f32.mrf.mxu0
      %v1482 = vadd.f32 0.0, %v1481
      %1483 = vdwg.mxu0
      %1484 = vmatpush.msra.mxu0 0.0
      %1485 = vmatpush.msra.mxu0 0.0
      %1486 = vmatpush.msra.mxu0 0.0
      %1487 = vmatpush.msra.mxu0 0.0
      %1488 = vmatpush.msra.mxu0 0.0
      %1489 = vmatpush.msra.mxu0 0.0
      %1490 = vmatpush.msra.mxu0 0.0
      %1491 = vmatpush.msra.mxu0 0.0
      %1492 = vmatpush.msra.mxu0 0.0
      %1493 = vmatpush.msra.mxu0 0.0
      %1494 = vmatpush.msra.mxu0 0.0
      %1495 = vmatpush.msra.mxu0 0.0
      %1496 = vmatpush.msra.mxu0 0.0
      %1497 = vmatpush.msra.mxu0 %v1460
      %1498 = vmatpush.msra.mxu0 %v1444
      %1499 = vmatpush.msra.mxu0 %v1441
      %1500 = vmatmul.f32.gmra.mxu0 %v1456
      %v1501 = vpop.f32.mrf.mxu0
      %v1502 = vadd.f32 0.0, %v1501
      %1503 = vdwg.mxu0
      %1504 = vmatpush.msra.mxu0 0.0
      %1505 = vmatpush.msra.mxu0 0.0
      %1506 = vmatpush.msra.mxu0 0.0
      %1507 = vmatpush.msra.mxu0 0.0
      %1508 = vmatpush.msra.mxu0 0.0
      %1509 = vmatpush.msra.mxu0 0.0
      %1510 = vmatpush.msra.mxu0 0.0
      %1511 = vmatpush.msra.mxu0 0.0
      %1512 = vmatpush.msra.mxu0 0.0
      %1513 = vmatpush.msra.mxu0 0.0
      %1514 = vmatpush.msra.mxu0 0.0
      %1515 = vmatpush.msra.mxu0 0.0
      %1516 = vmatpush.msra.mxu0 0.0
      %1517 = vmatpush.msra.mxu0 %v1462
      %1518 = vmatpush.msra.mxu0 %v1445
      %1519 = vmatpush.msra.mxu0 %v1442
      %1520 = vmatmul.f32.gmra.mxu0 %v1456
      %v1521 = vpop.f32.mrf.mxu0
      %v1522 = vadd.f32 0.0, %v1521
      %1523 = vdwg.mxu0
      %v1524 = vadd.f32 %v1410, %v1482
      %v1525 = vadd.f32 %v1411, %v1502
      %v1526 = vadd.f32 %v1412, %v1522
      %v1529 = vrot.slane %v1525, 4
      %vm1530 = vcmask 1043456
      %v1531 = vsel %vm1530, %v1524, %v1529
      %1533 = vst [vmem:[%s216] sm:$0xff] %v1531
      %1534 = vst [vmem:[%s216 + $0x8] sm:$0xf] %v1526
      %s1535 = smul.u32 3, %s20
      %p1536 = scmp.lt.s32.totalorder %s19, 1
      %s1537 = scalar_select %p1536, %s19, 1
      %p1538 = scmp.lt.s32.totalorder %s18, 1
      %s1539 = scalar_select %p1538, %s18, 1
      %p1540 = scmp.lt.s32.totalorder %s1535, 2
      %s1541 = scalar_select %p1540, %s1535, 2
      %s1542 = smul.addr %s1539, 3
      %s1543 = sadd.s32 %s1541, %s1542
      %s1544 = smul.addr %s1537, 6
      %s1545 = sadd.s32 %s1543, %s1544
      %s1546 = smul.addr %s1545, 4
      %s1547 = scalar_lea.vmem %s2, %s1546
      // Predicated region
      $region36: #{a_call__.2} parent=27 // pred_check
        %p1548 = pneg %p108
      $region37: #{a_call__.2} parent=27 // pred_check_branch
        %1550 = sbr.rel (%p1548) target = $region39
      $region38: #{a_call__.2} parent=27 // pred_region
        %s1551 = smul.u32 3, %s20
      $region39: #{a_call__.2} parent=27 // pred_fallthru
        _
    $region28: #{a_call__.2} parent=5 // pred_fallthru
      _
    %p1552 = scmp.le.s32.totalorder 2, %s8
    // Predicated region
    $region40: #{a_call__.2} parent=5 // pred_check
      %p1553 = pneg %p1552
    $region41: #{a_call__.2} parent=5 // pred_check_branch
      %1555 = sbr.rel (%p1553) target = $region43
    $region42: #{a_call__.2} parent=5 // pred_region
      %s1556 = ssub.s32 %s8, 2
      // Predicated region
      $region44: #{a_call__.2} parent=42 // pred_check
        %p1557 = pneg %p114
      $region45: #{a_call__.2} parent=42 // pred_check_branch
        %1559 = sbr.rel (%p1557) target = $region47
      $region46: #{a_call__.2} parent=42 // pred_region
        %s1560 = smul.u32 3, %s23
        %p1561 = scmp.lt.s32.totalorder %s22, 1
        %s1562 = scalar_select %p1561, %s22, 1
        %p1563 = scmp.lt.s32.totalorder %s21, 1
        %s1564 = scalar_select %p1563, %s21, 1
        %p1565 = scmp.lt.s32.totalorder %s1560, 2
        %s1566 = scalar_select %p1565, %s1560, 2
        %s1567 = smul.addr %s1564, 3
        %s1568 = sadd.s32 %s1566, %s1567
        %s1569 = smul.addr %s1562, 6
        %s1570 = sadd.s32 %s1568, %s1569
        %s1571 = smul.addr %s1570, 4
        %s1572 = scalar_lea.vmem %s2, %s1571
      $region47: #{a_call__.2} parent=42 // pred_fallthru
        _
    $region43: #{a_call__.2} parent=5 // pred_fallthru
      _
  $region6: #{a_call__.2} parent=0 // loop_footer
    %s12 = sadd.s32 1, %s8
  $region7: #{a_call__.2} parent=0 // loop_footer_branch
    %7 = sbr.rel target = $region3
  $region8: #{a_call__.2} parent=0 // loop_exit
    _

</llo_original>
